<compile_context>
chip_gen: v7x
topology: tpu7x:2x2x1
jax: 0.10.0
libtpu: 0.0.40
codegen_flags: <defaults>
</compile_context>

<pallas_src>
import functools

import jax
import jax.numpy as jnp
from jax.experimental import pallas as pl
from jax.experimental.pallas import tpu as pltpu

EPS = 1e-5


def _patch_merge_kernel(x0_ref, x1_ref, w0_ref, w1_ref, b_ref, s_ref, o_ref):
    """Fused 2x2 gather + LayerNorm(4C) + Linear(4C -> 2C, no bias).

    x0_ref: (BR, 1, W2, 2C)  even input rows (h_off=0), [w_off=0 | w_off=1] chans
    x1_ref: (BR, 1, W2, 2C)  odd  input rows (h_off=1)
    w0_ref: (2C, 2C) bf16    gamma-folded top    half of W^T
    w1_ref: (2C, 2C) bf16    gamma-folded bottom half of W^T
    b_ref : (1, 2C)  f32     beta @ W^T
    s_ref : (1, 2C)  f32     column sums of the gamma-folded W^T (mean folding)
    o_ref : (BR*W2, 2C)      merged output tokens (bf16)
    """
    c2 = w0_ref.shape[0]
    # Layout-preserving collapse of the leading dims (W2 is a multiple of the
    # sublane packing for the input dtype — asserted in the wrapper).
    x0 = x0_ref[...].reshape(-1, c2)
    x1 = x1_ref[...].reshape(-1, c2)
    x0f = x0.astype(jnp.float32)
    x1f = x1.astype(jnp.float32)

    # One-pass LayerNorm statistics over the full 4C feature (both halves), f32.
    inv_n = 1.0 / (2.0 * c2)
    mean = (jnp.sum(x0f, axis=-1, keepdims=True)
            + jnp.sum(x1f, axis=-1, keepdims=True)) * inv_n
    ex2 = (jnp.sum(x0f * x0f, axis=-1, keepdims=True)
           + jnp.sum(x1f * x1f, axis=-1, keepdims=True)) * inv_n
    rstd = jax.lax.rsqrt(ex2 - mean * mean + EPS)

    # MXU matmul on the uncentered bf16 tiles (astype is a no-op for bf16
    # inputs); the mean correction is applied on the f32 accumulator via the
    # precomputed column sums:  (t - mean) @ Wg = t @ Wg - mean * colsum(Wg).
    acc = jnp.dot(x0.astype(jnp.bfloat16), w0_ref[...],
                  preferred_element_type=jnp.float32)
    acc = acc + jnp.dot(x1.astype(jnp.bfloat16), w1_ref[...],
                        preferred_element_type=jnp.float32)
    o_ref[...] = (rstd * (acc - mean * s_ref[...]) + b_ref[...]).astype(o_ref.dtype)


def _pick_block_rows(num_rows, w2, target_tokens):
    """Rows per step: biggest divisor of num_rows within the token budget,
    preferring an even step count (>=4 steps) so both v7x cores stay balanced."""
    max_rows = max(1, target_tokens // max(w2, 1))
    divisors = [d for d in range(1, num_rows + 1) if num_rows % d == 0]
    fits = [d for d in divisors if d <= max_rows] or [1]

    def steps(d):
        return num_rows // d

    tiers = [
        [d for d in fits if steps(d) >= 4 and steps(d) % 2 == 0],
        [d for d in fits if steps(d) >= 2 and steps(d) % 2 == 0],
        [d for d in fits if steps(d) >= 2],
        fits,
    ]
    for tier in tiers:
        if tier:
            return max(tier)
    return 1


@functools.partial(jax.jit, static_argnames=("tm", "out_dtype"))
def patch_merging(x, gamma, beta, w_t, *, tm=4096, out_dtype=jnp.bfloat16):
    """x: (B, H, W, C) bf16 (or f32); gamma/beta: (4C,) f32; w_t: (4C, 2C) f32.

    tm = target tokens per grid step (4096 is sized for v7x's 64 MiB VMEM with
    a 48 MiB scoped limit; v6e/v5e can go to 8192)."""
    B, H, W, C = x.shape
    assert H % 2 == 0 and W % 2 == 0, "H and W must be even"
    C2, C4 = 2 * C, 4 * C

    R = B * (H // 2)       # flattened (b, h2) rows
    W2 = W // 2            # merged tokens per row
    N = R * W2             # total merged tokens

    # The in-kernel collapse (br,1,W2,2C)->(br*W2,2C) is layout-preserving only
    # if W2 is a multiple of the sublane packing for the input dtype.
    sub = 8 * (4 // jnp.dtype(x.dtype).itemsize)
    assert W2 % sub == 0, f"W//2 must be a multiple of {sub} for dtype {x.dtype}"
    # TODO(synk): pad W2 (e.g. the 28/14/7 Swin stages) instead of asserting.

    # Free reshape: (B, H, W, C) -> (R, 2, W2, 2C). Axis 1 is the h-offset of
    # the 2x2 window; the last dim already holds [w_off=0 chans | w_off=1 chans]
    # in exactly the order the reference view/permute/view produces.
    xr = x.reshape(R, 2, W2, C2)

    # One-time weight transform: fold the LayerNorm affine into the reduction
    # and precompute the mean-folding column sums and the beta term.
    wg = (gamma[:, None] * w_t).astype(jnp.bfloat16)
    w0 = wg[:C2]                                   # pairs with the even-row half
    w1 = wg[C2:]                                   # pairs with the odd-row half
    ss = jnp.sum(wg.astype(jnp.float32), axis=0).reshape(1, C2)
    bb = (beta @ w_t).reshape(1, C2).astype(jnp.float32)

    br = _pick_block_rows(R, W2, tm)               # (b,h2) rows per grid step
    tm_tokens = br * W2                            # tokens per grid step
    grid = (R // br,)

    in_bytes = jnp.dtype(x.dtype).itemsize
    out_bytes = jnp.dtype(out_dtype).itemsize
    cost = pl.CostEstimate(
        flops=2 * N * C4 * C2,
        transcendentals=N,
        bytes_accessed=in_bytes * N * C4 + out_bytes * N * C2 + 2 * C4 * C2,
    )

    out = pl.pallas_call(
        _patch_merge_kernel,
        out_shape=jax.ShapeDtypeStruct((N, C2), out_dtype),
        grid_spec=pltpu.PrefetchScalarGridSpec(
            num_scalar_prefetch=0,
            grid=grid,
            in_specs=[
                pl.BlockSpec((br, 1, W2, C2), lambda i: (i, 0, 0, 0)),  # h_off = 0
                pl.BlockSpec((br, 1, W2, C2), lambda i: (i, 1, 0, 0)),  # h_off = 1
                pl.BlockSpec((C2, C2), lambda i: (0, 0)),
                pl.BlockSpec((C2, C2), lambda i: (0, 0)),
                pl.BlockSpec((1, C2), lambda i: (0, 0)),
                pl.BlockSpec((1, C2), lambda i: (0, 0)),
            ],
            out_specs=pl.BlockSpec((tm_tokens, C2), lambda i: (i, 0)),
        ),
        compiler_params=pltpu.CompilerParams(
            dimension_semantics=("parallel",),
            vmem_limit_bytes=48 * 1024 * 1024,
        ),
        cost_estimate=cost,
    )(xr, xr, w0, w1, bb, ss)

    return out.reshape(B, H // 2, W2, C2)


def _reference(x, gamma, beta, w_t):
    """Exact f32 re-statement of the PyTorch module forward."""
    B, H, W, C = x.shape
    t = x.reshape(B, H // 2, 2, W // 2, 2, C)
    t = jnp.transpose(t, (0, 1, 3, 2, 4, 5)).reshape(B, H // 2, W // 2, 4 * C)
    mean = jnp.mean(t, axis=-1, keepdims=True)
    var = jnp.mean((t - mean) ** 2, axis=-1, keepdims=True)
    xn = (t - mean) / jnp.sqrt(var + EPS) * gamma + beta
    return jnp.einsum("bhwk,kd->bhwd", xn, w_t)


if __name__ == "__main__":
    key = jax.random.PRNGKey(0)
    B, H, W, C = 2, 32, 32, 64            # dim = C = 64 -> 4C = 256, 2C = 128

    kx, kw, kg, kb = jax.random.split(key, 4)
    # Producer hands over bf16 activations (no separate cast pass in the wrapper).
    x = jax.random.normal(kx, (B, H, W, C), dtype=jnp.float32).astype(jnp.bfloat16)

    # LayerNorm params (non-trivial, to exercise the affine folding) and the
    # Linear(4C, 2C, bias=False) weight.  PyTorch stores the weight as
    # (2C, 4C); the kernel consumes its transpose (4C, 2C) so that y = x @ W^T.
    gamma = 1.0 + 0.1 * jax.random.normal(kg, (4 * C,), dtype=jnp.float32)
    beta = 0.1 * jax.random.normal(kb, (4 * C,), dtype=jnp.float32)
    bound = 1.0 / jnp.sqrt(4.0 * C)
    w = jax.random.uniform(kw, (2 * C, 4 * C), jnp.float32, -bound, bound)
    w_t = w.T

    out = jax.block_until_ready(patch_merging(x, gamma, beta, w_t))

    ref = _reference(x.astype(jnp.float32), gamma, beta, w_t)
    assert out.shape == (B, H // 2, W // 2, 2 * C), out.shape
    assert out.dtype == jnp.bfloat16, out.dtype
    out_f32 = out.astype(jnp.float32)
    max_err = float(jnp.max(jnp.abs(out_f32 - ref)))
    # bf16 weights / bf16 output / uncentered bf16 MXU operands -> loose
    # tolerance; a gather or weight-folding bug would be O(1).
    assert jnp.allclose(out_f32, ref, atol=5e-2, rtol=5e-2), f"mismatch: {max_err}"

    print("KERNEL_OK")
</pallas_src>

<mosaic_0001>
module attributes {stable_mosaic.version = 11 : i64} {
  func.func @_patch_merge_kernel(%arg0: i32, %arg1: memref<8x1x16x128xbf16, #tpu.memory_space<vmem>>, %arg2: memref<8x1x16x128xbf16, #tpu.memory_space<vmem>>, %arg3: memref<128x128xbf16, #tpu.memory_space<vmem>>, %arg4: memref<128x128xbf16, #tpu.memory_space<vmem>>, %arg5: memref<1x128xf32, #tpu.memory_space<vmem>>, %arg6: memref<1x128xf32, #tpu.memory_space<vmem>>, %arg7: memref<128x128xbf16, #tpu.memory_space<vmem>>) attributes {dimension_semantics = [#tpu.dimension_semantics<parallel>], iteration_bounds = array<i64: 4>, scalar_prefetch = 0 : i64, scratch_operands = 0 : i64, tpu.core_type = #tpu.core_type<tc>, window_params = [{transform_indices = @transform_0, window_bounds = array<i64: 8, 1, 16, 128>}, {transform_indices = @transform_1, window_bounds = array<i64: 8, 1, 16, 128>}, {pipeline_mode = #tpu.pipeline_mode<synchronous>, transform_indices = @transform_2, window_bounds = array<i64: 128, 128>}, {pipeline_mode = #tpu.pipeline_mode<synchronous>, transform_indices = @transform_3, window_bounds = array<i64: 128, 128>}, {pipeline_mode = #tpu.pipeline_mode<synchronous>, transform_indices = @transform_4, window_bounds = array<i64: 1, 128>}, {pipeline_mode = #tpu.pipeline_mode<synchronous>, transform_indices = @transform_5, window_bounds = array<i64: 1, 128>}, {transform_indices = @transform_6, window_bounds = array<i64: 128, 128>}]} {
    %c0 = arith.constant 0 : index
    %c0_0 = arith.constant 0 : index
    %c0_1 = arith.constant 0 : index
    %c0_2 = arith.constant 0 : index
    %0 = vector.load %arg1[%c0, %c0_0, %c0_1, %c0_2] : memref<8x1x16x128xbf16, #tpu.memory_space<vmem>>, vector<8x1x16x128xbf16>
    %1 = vector.shape_cast %0 : vector<8x1x16x128xbf16> to vector<128x128xbf16>
    %c0_3 = arith.constant 0 : index
    %c0_4 = arith.constant 0 : index
    %c0_5 = arith.constant 0 : index
    %c0_6 = arith.constant 0 : index
    %2 = vector.load %arg2[%c0_3, %c0_4, %c0_5, %c0_6] : memref<8x1x16x128xbf16, #tpu.memory_space<vmem>>, vector<8x1x16x128xbf16>
    %3 = vector.shape_cast %2 : vector<8x1x16x128xbf16> to vector<128x128xbf16>
    %4 = arith.extf %1 : vector<128x128xbf16> to vector<128x128xf32>
    %5 = arith.extf %3 : vector<128x128xbf16> to vector<128x128xf32>
    %cst = arith.constant dense<0.000000e+00> : vector<128xf32>
    %6 = vector.multi_reduction <add>, %4, %cst [1] : vector<128x128xf32> to vector<128xf32>
    %7 = vector.shape_cast %6 : vector<128xf32> to vector<128x1xf32>
    %cst_7 = arith.constant dense<0.000000e+00> : vector<128xf32>
    %8 = vector.multi_reduction <add>, %5, %cst_7 [1] : vector<128x128xf32> to vector<128xf32>
    %9 = vector.shape_cast %8 : vector<128xf32> to vector<128x1xf32>
    %10 = arith.addf %7, %9 : vector<128x1xf32>
    %cst_8 = arith.constant 3.906250e-03 : f32
    %11 = vector.broadcast %cst_8 : f32 to vector<128x1xf32>
    %12 = arith.mulf %10, %11 : vector<128x1xf32>
    %13 = arith.mulf %4, %4 : vector<128x128xf32>
    %cst_9 = arith.constant dense<0.000000e+00> : vector<128xf32>
    %14 = vector.multi_reduction <add>, %13, %cst_9 [1] : vector<128x128xf32> to vector<128xf32>
    %15 = vector.shape_cast %14 : vector<128xf32> to vector<128x1xf32>
    %16 = arith.mulf %5, %5 : vector<128x128xf32>
    %cst_10 = arith.constant dense<0.000000e+00> : vector<128xf32>
    %17 = vector.multi_reduction <add>, %16, %cst_10 [1] : vector<128x128xf32> to vector<128xf32>
    %18 = vector.shape_cast %17 : vector<128xf32> to vector<128x1xf32>
    %19 = arith.addf %15, %18 : vector<128x1xf32>
    %cst_11 = arith.constant 3.906250e-03 : f32
    %20 = vector.broadcast %cst_11 : f32 to vector<128x1xf32>
    %21 = arith.mulf %19, %20 : vector<128x1xf32>
    %22 = arith.mulf %12, %12 : vector<128x1xf32>
    %23 = arith.subf %21, %22 : vector<128x1xf32>
    %cst_12 = arith.constant 9.99999974E-6 : f32
    %24 = vector.broadcast %cst_12 : f32 to vector<128x1xf32>
    %25 = arith.addf %23, %24 : vector<128x1xf32>
    %26 = math.rsqrt %25 : vector<128x1xf32>
    %c0_13 = arith.constant 0 : index
    %c0_14 = arith.constant 0 : index
    %27 = vector.load %arg3[%c0_13, %c0_14] : memref<128x128xbf16, #tpu.memory_space<vmem>>, vector<128x128xbf16>
    %cst_15 = arith.constant dense<0.000000e+00> : vector<128x128xf32>
    %28 = tpu.matmul %1, %27, %cst_15 {dimension_numbers = #tpu.dot_dimension_numbers<[1], [0], [0], [1], [0, 0, 1, 1], [], []>} : vector<128x128xbf16>, vector<128x128xbf16>, vector<128x128xf32> -> vector<128x128xf32>
    %c0_16 = arith.constant 0 : index
    %c0_17 = arith.constant 0 : index
    %29 = vector.load %arg4[%c0_16, %c0_17] : memref<128x128xbf16, #tpu.memory_space<vmem>>, vector<128x128xbf16>
    %cst_18 = arith.constant dense<0.000000e+00> : vector<128x128xf32>
    %30 = tpu.matmul %3, %29, %cst_18 {dimension_numbers = #tpu.dot_dimension_numbers<[1], [0], [0], [1], [0, 0, 1, 1], [], []>} : vector<128x128xbf16>, vector<128x128xbf16>, vector<128x128xf32> -> vector<128x128xf32>
    %31 = arith.addf %28, %30 : vector<128x128xf32>
    %c0_19 = arith.constant 0 : index
    %c0_20 = arith.constant 0 : index
    %32 = vector.load %arg6[%c0_19, %c0_20] : memref<1x128xf32, #tpu.memory_space<vmem>>, vector<1x128xf32>
    %33 = vector.broadcast %12 : vector<128x1xf32> to vector<128x128xf32>
    %34 = vector.broadcast %32 : vector<1x128xf32> to vector<128x128xf32>
    %35 = arith.mulf %33, %34 : vector<128x128xf32>
    %36 = arith.subf %31, %35 : vector<128x128xf32>
    %37 = vector.broadcast %26 : vector<128x1xf32> to vector<128x128xf32>
    %38 = arith.mulf %37, %36 : vector<128x128xf32>
    %c0_21 = arith.constant 0 : index
    %c0_22 = arith.constant 0 : index
    %39 = vector.load %arg5[%c0_21, %c0_22] : memref<1x128xf32, #tpu.memory_space<vmem>>, vector<1x128xf32>
    %40 = vector.broadcast %39 : vector<1x128xf32> to vector<128x128xf32>
    %41 = arith.addf %38, %40 : vector<128x128xf32>
    %42 = arith.truncf %41 : vector<128x128xf32> to vector<128x128xbf16>
    %c0_23 = arith.constant 0 : index
    %c0_24 = arith.constant 0 : index
    %43 = vector.load %arg7[%c0_23, %c0_24] : memref<128x128xbf16, #tpu.memory_space<vmem>>, vector<128x128xbf16>
    tpu.vector_store %arg7[%c0_23, %c0_24], %42 {strides = array<i32>} : memref<128x128xbf16, #tpu.memory_space<vmem>>, vector<128x128xbf16>,
    return
  }
  func.func @transform_0(%arg0: i32) -> (i32, i32, i32, i32) {
    %c0_i32 = arith.constant 0 : i32
    %c0_i32_0 = arith.constant 0 : i32
    %c0_i32_1 = arith.constant 0 : i32
    %c0_i32_2 = arith.constant 0 : i32
    return %arg0, %c0_i32, %c0_i32_0, %c0_i32_1 : i32, i32, i32, i32
  }
  func.func @transform_1(%arg0: i32) -> (i32, i32, i32, i32) {
    %c1_i32 = arith.constant 1 : i32
    %c0_i32 = arith.constant 0 : i32
    %c0_i32_0 = arith.constant 0 : i32
    %c0_i32_1 = arith.constant 0 : i32
    return %arg0, %c1_i32, %c0_i32, %c0_i32_0 : i32, i32, i32, i32
  }
  func.func @transform_2(%arg0: i32) -> (i32, i32) {
    %c0_i32 = arith.constant 0 : i32
    %c0_i32_0 = arith.constant 0 : i32
    %c0_i32_1 = arith.constant 0 : i32
    return %c0_i32, %c0_i32_0 : i32, i32
  }
  func.func @transform_3(%arg0: i32) -> (i32, i32) {
    %c0_i32 = arith.constant 0 : i32
    %c0_i32_0 = arith.constant 0 : i32
    %c0_i32_1 = arith.constant 0 : i32
    return %c0_i32, %c0_i32_0 : i32, i32
  }
  func.func @transform_4(%arg0: i32) -> (i32, i32) {
    %c0_i32 = arith.constant 0 : i32
    %c0_i32_0 = arith.constant 0 : i32
    %c0_i32_1 = arith.constant 0 : i32
    return %c0_i32, %c0_i32_0 : i32, i32
  }
  func.func @transform_5(%arg0: i32) -> (i32, i32) {
    %c0_i32 = arith.constant 0 : i32
    %c0_i32_0 = arith.constant 0 : i32
    %c0_i32_1 = arith.constant 0 : i32
    return %c0_i32, %c0_i32_0 : i32, i32
  }
  func.func @transform_6(%arg0: i32) -> (i32, i32) {
    %c0_i32 = arith.constant 0 : i32
    %c0_i32_0 = arith.constant 0 : i32
    return %arg0, %c0_i32 : i32, i32
  }
}

</mosaic_0001>

<llo_original>
// kernel: patch_merging.1
$region0: #{patch_merging.1}
  #allocation0 [shape = 'u32[]', space=smem, size = 0x4, offset = 0x4, fixed_abs, tag = 'smem constant byte address 0x4 - core index']
  #allocation1 [shape = 'u32[144,128]{1,0:T(1,128)}', space=vmem, size = 0x12000, scoped, tag = 'internal scratch']
  %s0 = inlined_call_operand.vmem [shape: bf16[32,2,16,128], index: 0, kind: input, shape index: {}, may-alias: {0,1}]
  %s1 = inlined_call_operand.vmem [shape: bf16[32,2,16,128], index: 1, kind: input, shape index: {}, may-alias: {0,1}]
  %s2 = inlined_call_operand.vmem [shape: bf16[128,128], index: 2, kind: input, shape index: {}]
  %s3 = inlined_call_operand.vmem [shape: bf16[128,128], index: 3, kind: input, shape index: {}]
  %s4 = inlined_call_operand.vmem [shape: f32[1,128], index: 4, kind: input, shape index: {}]
  %s5 = inlined_call_operand.vmem [shape: f32[1,128], index: 5, kind: input, shape index: {}]
  %s6 = inlined_call_operand.hbm [shape: bf16[512,128], index: 6, kind: output, shape index: {}]
  %s7 = sld [smem:[#allocation0]]
  $region139: #{patch_merging.1} parent=0
    _
  %s9 = ssub.s32 1, %s7
  %s10 = scalar_select 0, %s9, %s7
  $region1: #{patch_merging.1} parent=0
    #allocation2 [shape = 'u8[65536]{0}', space=vmem, size = 0x10000, scoped, tag = 'input window, operand 0']
    #allocation3 [shape = 'u8[65536]{0}', space=vmem, size = 0x10000, scoped, tag = 'input window, operand 1']
    #allocation4 [shape = 'u8[65536]{0}', space=vmem, size = 0x10000, scoped, tag = 'output window, operand 0']
    #allocation5 [shape = 's32[2]{0}', space=sflag, size = 0x8, scoped, tag = 'scoped memory for patch_merging.1']
    %11 = vsyncpa [#allocation5], 0
    %s12 = scalar_lea.sflag [#allocation5], 1
    %13 = vsyncpa %s12, 0
    loop: start=0, step=1, limit=6
    $region2: #{patch_merging.1} parent=1 // loop_pre_header
      _
    $region3: #{patch_merging.1} parent=1 // loop_header
      %s15 = sphi 0, %s19
      %p16 = scmp.ge.s32.totalorder %s15, 6
      %s25 = sphi 0, %s27
      %s28 = sphi 0, %s25
      %s29 = sphi 0, %s28
      %s45 = sphi 0, %s29
      %s51 = sphi 0, %s53
      %s54 = sphi 0, %s51
      %s55 = sphi 0, %s54
      %s71 = sphi 0, %s55
      %s75 = sphi 0, %s75
      %s77 = sphi 0, %s75
      %s78 = sphi 0, %s77
      %s92 = sphi 0, %s78
      %s96 = sphi 0, %s96
      %s98 = sphi 0, %s96
      %s99 = sphi 0, %s98
      %s113 = sphi 0, %s99
      %s117 = sphi 0, %s117
      %s119 = sphi 0, %s117
      %s120 = sphi 0, %s119
      %s134 = sphi 0, %s120
      %s138 = sphi 0, %s138
      %s140 = sphi 0, %s138
      %s141 = sphi 0, %s140
      %s155 = sphi 0, %s141
      %s161 = sphi 0, %s163
      %s164 = sphi 0, %s161
      %s165 = sphi 0, %s164
      %s181 = sphi 0, %s165
    $region4: #{patch_merging.1} parent=1 // loop_header_branch
      %18 = sbr.rel (%p16) target = $region8
    $region5: #{patch_merging.1} parent=1 // loop_body
      %s20 = ssub.s32 %s15, 1
      %s21 = ssub.s32 %s15, 2
      %s22 = sadd.s32 %s15, 1
      %s23 = ssub.s32 %s15, %s22
      %p24 = scmp.eq.s32.totalorder %s23, 0
      %s26 = sadd.s32 %s25, 1
      %s27 = scalar_select %p24, %s25, %s26
      %p30 = pneg %p24
      %p31 = scmp.eq.s32.totalorder %s15, 3
      %p32 = por %p30, %p31
      %p33 = scmp.ne.s32.totalorder %s25, %s28
      %p34 = scmp.eq.s32.totalorder %s15, 0
      %p35 = por %p33, %p34
      %p36 = scmp.ne.s32.totalorder %s25, %s28
      %p37 = scmp.eq.s32.totalorder %s20, 3
      %p38 = por %p36, %p37
      %p39 = scmp.ne.s32.totalorder %s28, %s29
      %p40 = scmp.eq.s32.totalorder %s20, 0
      %p41 = por %p39, %p40
      %p42 = scmp.ne.s32.totalorder %s28, %s29
      %p43 = scmp.eq.s32.totalorder %s21, 3
      %p44 = por %p42, %p43
      %p46 = scmp.ne.s32.totalorder %s29, %s45
      %p47 = scmp.eq.s32.totalorder %s21, 0
      %p48 = por %p46, %p47
      %s49 = ssub.s32 %s15, %s22
      %p50 = scmp.eq.s32.totalorder %s49, 0
      %s52 = sadd.s32 %s51, 1
      %s53 = scalar_select %p50, %s51, %s52
      %p56 = pneg %p50
      %p57 = scmp.eq.s32.totalorder %s15, 3
      %p58 = por %p56, %p57
      %p59 = scmp.ne.s32.totalorder %s51, %s54
      %p60 = scmp.eq.s32.totalorder %s15, 0
      %p61 = por %p59, %p60
      %p62 = scmp.ne.s32.totalorder %s51, %s54
      %p63 = scmp.eq.s32.totalorder %s20, 3
      %p64 = por %p62, %p63
      %p65 = scmp.ne.s32.totalorder %s54, %s55
      %p66 = scmp.eq.s32.totalorder %s20, 0
      %p67 = por %p65, %p66
      %p68 = scmp.ne.s32.totalorder %s54, %s55
      %p69 = scmp.eq.s32.totalorder %s21, 3
      %p70 = por %p68, %p69
      %p72 = scmp.ne.s32.totalorder %s55, %s71
      %p73 = scmp.eq.s32.totalorder %s21, 0
      %p74 = por %p72, %p73
      %s76 = sadd.s32 %s75, 1
      %p79 = scmp.eq.s32.totalorder %s15, 3
      %p80 = scmp.ne.s32.totalorder %s75, %s77
      %p81 = scmp.eq.s32.totalorder %s15, 0
      %p82 = por %p80, %p81
      %p83 = scmp.ne.s32.totalorder %s75, %s77
      %p84 = scmp.eq.s32.totalorder %s20, 3
      %p85 = por %p83, %p84
      %p86 = scmp.ne.s32.totalorder %s77, %s78
      %p87 = scmp.eq.s32.totalorder %s20, 0
      %p88 = por %p86, %p87
      %p89 = scmp.ne.s32.totalorder %s77, %s78
      %p90 = scmp.eq.s32.totalorder %s21, 3
      %p91 = por %p89, %p90
      %p93 = scmp.ne.s32.totalorder %s78, %s92
      %p94 = scmp.eq.s32.totalorder %s21, 0
      %p95 = por %p93, %p94
      %s97 = sadd.s32 %s96, 1
      %p100 = scmp.eq.s32.totalorder %s15, 3
      %p101 = scmp.ne.s32.totalorder %s96, %s98
      %p102 = scmp.eq.s32.totalorder %s15, 0
      %p103 = por %p101, %p102
      %p104 = scmp.ne.s32.totalorder %s96, %s98
      %p105 = scmp.eq.s32.totalorder %s20, 3
      %p106 = por %p104, %p105
      %p107 = scmp.ne.s32.totalorder %s98, %s99
      %p108 = scmp.eq.s32.totalorder %s20, 0
      %p109 = por %p107, %p108
      %p110 = scmp.ne.s32.totalorder %s98, %s99
      %p111 = scmp.eq.s32.totalorder %s21, 3
      %p112 = por %p110, %p111
      %p114 = scmp.ne.s32.totalorder %s99, %s113
      %p115 = scmp.eq.s32.totalorder %s21, 0
      %p116 = por %p114, %p115
      %s118 = sadd.s32 %s117, 1
      %p121 = scmp.eq.s32.totalorder %s15, 3
      %p122 = scmp.ne.s32.totalorder %s117, %s119
      %p123 = scmp.eq.s32.totalorder %s15, 0
      %p124 = por %p122, %p123
      %p125 = scmp.ne.s32.totalorder %s117, %s119
      %p126 = scmp.eq.s32.totalorder %s20, 3
      %p127 = por %p125, %p126
      %p128 = scmp.ne.s32.totalorder %s119, %s120
      %p129 = scmp.eq.s32.totalorder %s20, 0
      %p130 = por %p128, %p129
      %p131 = scmp.ne.s32.totalorder %s119, %s120
      %p132 = scmp.eq.s32.totalorder %s21, 3
      %p133 = por %p131, %p132
      %p135 = scmp.ne.s32.totalorder %s120, %s134
      %p136 = scmp.eq.s32.totalorder %s21, 0
      %p137 = por %p135, %p136
      %s139 = sadd.s32 %s138, 1
      %p142 = scmp.eq.s32.totalorder %s15, 3
      %p143 = scmp.ne.s32.totalorder %s138, %s140
      %p144 = scmp.eq.s32.totalorder %s15, 0
      %p145 = por %p143, %p144
      %p146 = scmp.ne.s32.totalorder %s138, %s140
      %p147 = scmp.eq.s32.totalorder %s20, 3
      %p148 = por %p146, %p147
      %p149 = scmp.ne.s32.totalorder %s140, %s141
      %p150 = scmp.eq.s32.totalorder %s20, 0
      %p151 = por %p149, %p150
      %p152 = scmp.ne.s32.totalorder %s140, %s141
      %p153 = scmp.eq.s32.totalorder %s21, 3
      %p154 = por %p152, %p153
      %p156 = scmp.ne.s32.totalorder %s141, %s155
      %p157 = scmp.eq.s32.totalorder %s21, 0
      %p158 = por %p156, %p157
      %s159 = ssub.s32 %s15, %s22
      %p160 = scmp.eq.s32.totalorder %s159, 0
      %s162 = sadd.s32 %s161, 1
      %s163 = scalar_select %p160, %s161, %s162
      %p166 = pneg %p160
      %p167 = scmp.eq.s32.totalorder %s15, 3
      %p168 = por %p166, %p167
      %p169 = scmp.ne.s32.totalorder %s161, %s164
      %p170 = scmp.eq.s32.totalorder %s15, 0
      %p171 = por %p169, %p170
      %p172 = scmp.ne.s32.totalorder %s161, %s164
      %p173 = scmp.eq.s32.totalorder %s20, 3
      %p174 = por %p172, %p173
      %p175 = scmp.ne.s32.totalorder %s164, %s165
      %p176 = scmp.eq.s32.totalorder %s20, 0
      %p177 = por %p175, %p176
      %p178 = scmp.ne.s32.totalorder %s164, %s165
      %p179 = scmp.eq.s32.totalorder %s21, 3
      %p180 = por %p178, %p179
      %p182 = scmp.ne.s32.totalorder %s165, %s181
      %p183 = scmp.eq.s32.totalorder %s21, 0
      %p184 = por %p182, %p183
      %p185 = scmp.le.s32.totalorder 1, %s15
      %p186 = scmp.lt.s32.totalorder %s15, 5
      %p187 = pnand %p185, %p186
      %p188 = pneg %p187
      // Predicated region
      $region9: #{patch_merging.1} parent=5 // pred_check
        _
      $region10: #{patch_merging.1} parent=5 // pred_check_branch
        %190 = sbr.rel (%p187) target = $region12
      $region11: #{patch_merging.1} parent=5 // pred_region
        %s191 = ssub.s32 %s15, 1
        // Predicated region
        $region13: #{patch_merging.1} parent=11 // pred_check
          %p192 = pneg %p88
        $region14: #{patch_merging.1} parent=11 // pred_check_branch
          %194 = sbr.rel (%p192) target = $region16
        $region15: #{patch_merging.1} parent=11 // pred_region
          _
        $region16: #{patch_merging.1} parent=11 // pred_fallthru
          _
        // Predicated region
        $region17: #{patch_merging.1} parent=11 // pred_check
          %p195 = pneg %p109
        $region18: #{patch_merging.1} parent=11 // pred_check_branch
          %197 = sbr.rel (%p195) target = $region20
        $region19: #{patch_merging.1} parent=11 // pred_region
          _
        $region20: #{patch_merging.1} parent=11 // pred_fallthru
          _
        // Predicated region
        $region21: #{patch_merging.1} parent=11 // pred_check
          %p198 = pneg %p130
        $region22: #{patch_merging.1} parent=11 // pred_check_branch
          %200 = sbr.rel (%p198) target = $region24
        $region23: #{patch_merging.1} parent=11 // pred_region
          _
        $region24: #{patch_merging.1} parent=11 // pred_fallthru
          _
        // Predicated region
        $region25: #{patch_merging.1} parent=11 // pred_check
          %p201 = pneg %p151
        $region26: #{patch_merging.1} parent=11 // pred_check_branch
          %203 = sbr.rel (%p201) target = $region28
        $region27: #{patch_merging.1} parent=11 // pred_region
          _
        $region28: #{patch_merging.1} parent=11 // pred_fallthru
          _
      $region12: #{patch_merging.1} parent=5 // pred_fallthru
        _
      %p204 = scmp.lt.s32.totalorder %s15, 4
      // Predicated region
      $region29: #{patch_merging.1} parent=5 // pred_check
        %p205 = pneg %p204
      $region30: #{patch_merging.1} parent=5 // pred_check_branch
        %207 = sbr.rel (%p205) target = $region32
      $region31: #{patch_merging.1} parent=5 // pred_region
        // Predicated region
        $region33: #{patch_merging.1} parent=31 // pred_check
          %p208 = pneg %p35
        $region34: #{patch_merging.1} parent=31 // pred_check_branch
          %210 = sbr.rel (%p208) target = $region36
        $region35: #{patch_merging.1} parent=31 // pred_region
          %s211 = sand.u32 %s25, 1
          %s212 = sand.u32 %s25, 1
          %s213 = smul.addr %s212, 64
          %s214 = scalar_lea.vmem [#allocation2], %s213
          %s215 = smul.u32 8, %s15
          %s216 = smul.addr %s215, 4
          %s217 = smul.addr %s216, 4
          %s218 = scalar_lea.vmem %s0, %s217
          // Predicated region
          $region37: #{patch_merging.1} parent=35 // pred_check
            _
          $region38: #{patch_merging.1} parent=35 // pred_check_branch
            %220 = sbr.rel (0) target = $region40
          $region39: #{patch_merging.1} parent=35 // pred_region
            // Predicated region
            $region41: #{patch_merging.1} parent=39 // pred_check
              _
            $region42: #{patch_merging.1} parent=39 // pred_check_branch
              %222 = sbr.rel target = $region44
            $region43: #{patch_merging.1} parent=39 // pred_region
              // Predicated region
              $region56: #{patch_merging.1} parent=43 // pred_check
                _
              $region57: #{patch_merging.1} parent=43 // pred_check_branch
                %267 = sbr.rel (0) target = $region59
              $region58: #{patch_merging.1} parent=43 // pred_region
                loop: start=0, step=1, limit=1
                $region60: #{patch_merging.1} parent=58 // loop_pre_header
                  _
                $region61: #{patch_merging.1} parent=58 // loop_header
                  %s269 = sphi 0, %s273
                  %p270 = scmp.ge.s32.totalorder %s269, 1
                  %s274 = sphi %s218, %s218
                  %s275 = sphi %s214, %s214
                $region62: #{patch_merging.1} parent=58 // loop_header_branch
                  %272 = sbr.rel (%p270) target = $region66
                $region63: #{patch_merging.1} parent=58 // loop_body
                  _
                $region64: #{patch_merging.1} parent=58 // loop_footer
                  %s273 = sadd.s32 1, %s269
                $region65: #{patch_merging.1} parent=58 // loop_footer_branch
                  %268 = sbr.rel target = $region61
                $region66: #{patch_merging.1} parent=58 // loop_exit
                  _
                loop: start=0, step=1, limit=1
                $region67: #{patch_merging.1} parent=58 // loop_pre_header
                  _
                $region68: #{patch_merging.1} parent=58 // loop_header
                  %s278 = sphi 0, %s282
                  %p279 = scmp.ge.s32.totalorder %s278, 1
                  %s283 = sphi %s218, %s218
                  %s284 = sphi %s214, %s214
                $region69: #{patch_merging.1} parent=58 // loop_header_branch
                  %281 = sbr.rel (%p279) target = $region73
                $region70: #{patch_merging.1} parent=58 // loop_body
                  %v285 = vld [vmem:[%s283] sm:$0xf]
                  %286 = vst [vmem:[%s284] sm:$0xf] %v285
                  %v287 = vld [vmem:[%s283 + $0x4] sm:$0xf]
                  %288 = vst [vmem:[%s284 + $0x4] sm:$0xf] %v287
                  %v289 = vld [vmem:[%s283 + $0x10] sm:$0xf]
                  %290 = vst [vmem:[%s284 + $0x8] sm:$0xf] %v289
                  %v291 = vld [vmem:[%s283 + $0x14] sm:$0xf]
                  %292 = vst [vmem:[%s284 + $0xc] sm:$0xf] %v291
                  %v293 = vld [vmem:[%s283 + $0x20] sm:$0xf]
                  %294 = vst [vmem:[%s284 + $0x10] sm:$0xf] %v293
                  %v295 = vld [vmem:[%s283 + $0x24] sm:$0xf]
                  %296 = vst [vmem:[%s284 + $0x14] sm:$0xf] %v295
                  %v297 = vld [vmem:[%s283 + $0x30] sm:$0xf]
                  %298 = vst [vmem:[%s284 + $0x18] sm:$0xf] %v297
                  %v299 = vld [vmem:[%s283 + $0x34] sm:$0xf]
                  %300 = vst [vmem:[%s284 + $0x1c] sm:$0xf] %v299
                  %v301 = vld [vmem:[%s283 + $0x40] sm:$0xf]
                  %302 = vst [vmem:[%s284 + $0x20] sm:$0xf] %v301
                  %v303 = vld [vmem:[%s283 + $0x44] sm:$0xf]
                  %304 = vst [vmem:[%s284 + $0x24] sm:$0xf] %v303
                  %v305 = vld [vmem:[%s283 + $0x50] sm:$0xf]
                  %306 = vst [vmem:[%s284 + $0x28] sm:$0xf] %v305
                  %v307 = vld [vmem:[%s283 + $0x54] sm:$0xf]
                  %308 = vst [vmem:[%s284 + $0x2c] sm:$0xf] %v307
                  %v309 = vld [vmem:[%s283 + $0x60] sm:$0xf]
                  %310 = vst [vmem:[%s284 + $0x30] sm:$0xf] %v309
                  %v311 = vld [vmem:[%s283 + $0x64] sm:$0xf]
                  %312 = vst [vmem:[%s284 + $0x34] sm:$0xf] %v311
                  %v313 = vld [vmem:[%s283 + $0x70] sm:$0xf]
                  %314 = vst [vmem:[%s284 + $0x38] sm:$0xf] %v313
                  %v315 = vld [vmem:[%s283 + $0x74] sm:$0xf]
                  %316 = vst [vmem:[%s284 + $0x3c] sm:$0xf] %v315
                $region71: #{patch_merging.1} parent=58 // loop_footer
                  %s282 = sadd.s32 1, %s278
                $region72: #{patch_merging.1} parent=58 // loop_footer_branch
                  %277 = sbr.rel target = $region68
                $region73: #{patch_merging.1} parent=58 // loop_exit
                  _
              $region59: #{patch_merging.1} parent=43 // pred_fallthru
                _
            $region44: #{patch_merging.1} parent=39 // pred_fallthru
              _
            // Predicated region
            $region45: #{patch_merging.1} parent=39 // pred_check
              _
            $region46: #{patch_merging.1} parent=39 // pred_check_branch
              %224 = sbr.rel (0) target = $region48
            $region47: #{patch_merging.1} parent=39 // pred_region
              loop: start=0, step=1, limit=1
              $region49: #{patch_merging.1} parent=47 // loop_pre_header
                _
              $region50: #{patch_merging.1} parent=47 // loop_header
                %s227 = sphi 0, %s231
                %p228 = scmp.ge.s32.totalorder %s227, 1
                %s232 = sphi %s218, %s218
                %s233 = sphi %s214, %s214
              $region51: #{patch_merging.1} parent=47 // loop_header_branch
                %230 = sbr.rel (%p228) target = $region55
              $region52: #{patch_merging.1} parent=47 // loop_body
                %v234 = vld [vmem:[%s232] sm:$0xf]
                %235 = vst [vmem:[%s233] sm:$0xf] %v234
                %v236 = vld [vmem:[%s232 + $0x4] sm:$0xf]
                %237 = vst [vmem:[%s233 + $0x4] sm:$0xf] %v236
                %v238 = vld [vmem:[%s232 + $0x10] sm:$0xf]
                %239 = vst [vmem:[%s233 + $0x8] sm:$0xf] %v238
                %v240 = vld [vmem:[%s232 + $0x14] sm:$0xf]
                %241 = vst [vmem:[%s233 + $0xc] sm:$0xf] %v240
                %v242 = vld [vmem:[%s232 + $0x20] sm:$0xf]
                %243 = vst [vmem:[%s233 + $0x10] sm:$0xf] %v242
                %v244 = vld [vmem:[%s232 + $0x24] sm:$0xf]
                %245 = vst [vmem:[%s233 + $0x14] sm:$0xf] %v244
                %v246 = vld [vmem:[%s232 + $0x30] sm:$0xf]
                %247 = vst [vmem:[%s233 + $0x18] sm:$0xf] %v246
                %v248 = vld [vmem:[%s232 + $0x34] sm:$0xf]
                %249 = vst [vmem:[%s233 + $0x1c] sm:$0xf] %v248
                %v250 = vld [vmem:[%s232 + $0x40] sm:$0xf]
                %251 = vst [vmem:[%s233 + $0x20] sm:$0xf] %v250
                %v252 = vld [vmem:[%s232 + $0x44] sm:$0xf]
                %253 = vst [vmem:[%s233 + $0x24] sm:$0xf] %v252
                %v254 = vld [vmem:[%s232 + $0x50] sm:$0xf]
                %255 = vst [vmem:[%s233 + $0x28] sm:$0xf] %v254
                %v256 = vld [vmem:[%s232 + $0x54] sm:$0xf]
                %257 = vst [vmem:[%s233 + $0x2c] sm:$0xf] %v256
                %v258 = vld [vmem:[%s232 + $0x60] sm:$0xf]
                %259 = vst [vmem:[%s233 + $0x30] sm:$0xf] %v258
                %v260 = vld [vmem:[%s232 + $0x64] sm:$0xf]
                %261 = vst [vmem:[%s233 + $0x34] sm:$0xf] %v260
                %v262 = vld [vmem:[%s232 + $0x70] sm:$0xf]
                %263 = vst [vmem:[%s233 + $0x38] sm:$0xf] %v262
                %v264 = vld [vmem:[%s232 + $0x74] sm:$0xf]
                %265 = vst [vmem:[%s233 + $0x3c] sm:$0xf] %v264
              $region53: #{patch_merging.1} parent=47 // loop_footer
                %s231 = sadd.s32 1, %s227
              $region54: #{patch_merging.1} parent=47 // loop_footer_branch
                %226 = sbr.rel target = $region50
              $region55: #{patch_merging.1} parent=47 // loop_exit
                _
            $region48: #{patch_merging.1} parent=39 // pred_fallthru
              _
          $region40: #{patch_merging.1} parent=35 // pred_fallthru
            _
          %317 = vnop
        $region36: #{patch_merging.1} parent=31 // pred_fallthru
          _
        // Predicated region
        $region74: #{patch_merging.1} parent=31 // pred_check
          %p318 = pneg %p61
        $region75: #{patch_merging.1} parent=31 // pred_check_branch
          %320 = sbr.rel (%p318) target = $region77
        $region76: #{patch_merging.1} parent=31 // pred_region
          %s321 = sand.u32 %s51, 1
          %s322 = sand.u32 %s51, 1
          %s323 = smul.addr %s322, 64
          %s324 = scalar_lea.vmem [#allocation3], %s323
          %s325 = smul.u32 8, %s15
          %s326 = smul.addr %s325, 4
          %s327 = sadd.s32 2, %s326
          %s328 = smul.addr %s327, 4
          %s329 = scalar_lea.vmem %s1, %s328
          // Predicated region
          $region78: #{patch_merging.1} parent=76 // pred_check
            _
          $region79: #{patch_merging.1} parent=76 // pred_check_branch
            %331 = sbr.rel (0) target = $region81
          $region80: #{patch_merging.1} parent=76 // pred_region
            // Predicated region
            $region82: #{patch_merging.1} parent=80 // pred_check
              _
            $region83: #{patch_merging.1} parent=80 // pred_check_branch
              %333 = sbr.rel target = $region85
            $region84: #{patch_merging.1} parent=80 // pred_region
              // Predicated region
              $region97: #{patch_merging.1} parent=84 // pred_check
                _
              $region98: #{patch_merging.1} parent=84 // pred_check_branch
                %378 = sbr.rel (0) target = $region100
              $region99: #{patch_merging.1} parent=84 // pred_region
                loop: start=0, step=1, limit=1
                $region101: #{patch_merging.1} parent=99 // loop_pre_header
                  _
                $region102: #{patch_merging.1} parent=99 // loop_header
                  %s380 = sphi 0, %s384
                  %p381 = scmp.ge.s32.totalorder %s380, 1
                  %s385 = sphi %s329, %s329
                  %s386 = sphi %s324, %s324
                $region103: #{patch_merging.1} parent=99 // loop_header_branch
                  %383 = sbr.rel (%p381) target = $region107
                $region104: #{patch_merging.1} parent=99 // loop_body
                  _
                $region105: #{patch_merging.1} parent=99 // loop_footer
                  %s384 = sadd.s32 1, %s380
                $region106: #{patch_merging.1} parent=99 // loop_footer_branch
                  %379 = sbr.rel target = $region102
                $region107: #{patch_merging.1} parent=99 // loop_exit
                  _
                loop: start=0, step=1, limit=1
                $region108: #{patch_merging.1} parent=99 // loop_pre_header
                  _
                $region109: #{patch_merging.1} parent=99 // loop_header
                  %s389 = sphi 0, %s393
                  %p390 = scmp.ge.s32.totalorder %s389, 1
                  %s394 = sphi %s329, %s329
                  %s395 = sphi %s324, %s324
                $region110: #{patch_merging.1} parent=99 // loop_header_branch
                  %392 = sbr.rel (%p390) target = $region114
                $region111: #{patch_merging.1} parent=99 // loop_body
                  %v396 = vld [vmem:[%s394] sm:$0xf]
                  %397 = vst [vmem:[%s395] sm:$0xf] %v396
                  %v398 = vld [vmem:[%s394 + $0x4] sm:$0xf]
                  %399 = vst [vmem:[%s395 + $0x4] sm:$0xf] %v398
                  %v400 = vld [vmem:[%s394 + $0x10] sm:$0xf]
                  %401 = vst [vmem:[%s395 + $0x8] sm:$0xf] %v400
                  %v402 = vld [vmem:[%s394 + $0x14] sm:$0xf]
                  %403 = vst [vmem:[%s395 + $0xc] sm:$0xf] %v402
                  %v404 = vld [vmem:[%s394 + $0x20] sm:$0xf]
                  %405 = vst [vmem:[%s395 + $0x10] sm:$0xf] %v404
                  %v406 = vld [vmem:[%s394 + $0x24] sm:$0xf]
                  %407 = vst [vmem:[%s395 + $0x14] sm:$0xf] %v406
                  %v408 = vld [vmem:[%s394 + $0x30] sm:$0xf]
                  %409 = vst [vmem:[%s395 + $0x18] sm:$0xf] %v408
                  %v410 = vld [vmem:[%s394 + $0x34] sm:$0xf]
                  %411 = vst [vmem:[%s395 + $0x1c] sm:$0xf] %v410
                  %v412 = vld [vmem:[%s394 + $0x40] sm:$0xf]
                  %413 = vst [vmem:[%s395 + $0x20] sm:$0xf] %v412
                  %v414 = vld [vmem:[%s394 + $0x44] sm:$0xf]
                  %415 = vst [vmem:[%s395 + $0x24] sm:$0xf] %v414
                  %v416 = vld [vmem:[%s394 + $0x50] sm:$0xf]
                  %417 = vst [vmem:[%s395 + $0x28] sm:$0xf] %v416
                  %v418 = vld [vmem:[%s394 + $0x54] sm:$0xf]
                  %419 = vst [vmem:[%s395 + $0x2c] sm:$0xf] %v418
                  %v420 = vld [vmem:[%s394 + $0x60] sm:$0xf]
                  %421 = vst [vmem:[%s395 + $0x30] sm:$0xf] %v420
                  %v422 = vld [vmem:[%s394 + $0x64] sm:$0xf]
                  %423 = vst [vmem:[%s395 + $0x34] sm:$0xf] %v422
                  %v424 = vld [vmem:[%s394 + $0x70] sm:$0xf]
                  %425 = vst [vmem:[%s395 + $0x38] sm:$0xf] %v424
                  %v426 = vld [vmem:[%s394 + $0x74] sm:$0xf]
                  %427 = vst [vmem:[%s395 + $0x3c] sm:$0xf] %v426
                $region112: #{patch_merging.1} parent=99 // loop_footer
                  %s393 = sadd.s32 1, %s389
                $region113: #{patch_merging.1} parent=99 // loop_footer_branch
                  %388 = sbr.rel target = $region109
                $region114: #{patch_merging.1} parent=99 // loop_exit
                  _
              $region100: #{patch_merging.1} parent=84 // pred_fallthru
                _
            $region85: #{patch_merging.1} parent=80 // pred_fallthru
              _
            // Predicated region
            $region86: #{patch_merging.1} parent=80 // pred_check
              _
            $region87: #{patch_merging.1} parent=80 // pred_check_branch
              %335 = sbr.rel (0) target = $region89
            $region88: #{patch_merging.1} parent=80 // pred_region
              loop: start=0, step=1, limit=1
              $region90: #{patch_merging.1} parent=88 // loop_pre_header
                _
              $region91: #{patch_merging.1} parent=88 // loop_header
                %s338 = sphi 0, %s342
                %p339 = scmp.ge.s32.totalorder %s338, 1
                %s343 = sphi %s329, %s329
                %s344 = sphi %s324, %s324
              $region92: #{patch_merging.1} parent=88 // loop_header_branch
                %341 = sbr.rel (%p339) target = $region96
              $region93: #{patch_merging.1} parent=88 // loop_body
                %v345 = vld [vmem:[%s343] sm:$0xf]
                %346 = vst [vmem:[%s344] sm:$0xf] %v345
                %v347 = vld [vmem:[%s343 + $0x4] sm:$0xf]
                %348 = vst [vmem:[%s344 + $0x4] sm:$0xf] %v347
                %v349 = vld [vmem:[%s343 + $0x10] sm:$0xf]
                %350 = vst [vmem:[%s344 + $0x8] sm:$0xf] %v349
                %v351 = vld [vmem:[%s343 + $0x14] sm:$0xf]
                %352 = vst [vmem:[%s344 + $0xc] sm:$0xf] %v351
                %v353 = vld [vmem:[%s343 + $0x20] sm:$0xf]
                %354 = vst [vmem:[%s344 + $0x10] sm:$0xf] %v353
                %v355 = vld [vmem:[%s343 + $0x24] sm:$0xf]
                %356 = vst [vmem:[%s344 + $0x14] sm:$0xf] %v355
                %v357 = vld [vmem:[%s343 + $0x30] sm:$0xf]
                %358 = vst [vmem:[%s344 + $0x18] sm:$0xf] %v357
                %v359 = vld [vmem:[%s343 + $0x34] sm:$0xf]
                %360 = vst [vmem:[%s344 + $0x1c] sm:$0xf] %v359
                %v361 = vld [vmem:[%s343 + $0x40] sm:$0xf]
                %362 = vst [vmem:[%s344 + $0x20] sm:$0xf] %v361
                %v363 = vld [vmem:[%s343 + $0x44] sm:$0xf]
                %364 = vst [vmem:[%s344 + $0x24] sm:$0xf] %v363
                %v365 = vld [vmem:[%s343 + $0x50] sm:$0xf]
                %366 = vst [vmem:[%s344 + $0x28] sm:$0xf] %v365
                %v367 = vld [vmem:[%s343 + $0x54] sm:$0xf]
                %368 = vst [vmem:[%s344 + $0x2c] sm:$0xf] %v367
                %v369 = vld [vmem:[%s343 + $0x60] sm:$0xf]
                %370 = vst [vmem:[%s344 + $0x30] sm:$0xf] %v369
                %v371 = vld [vmem:[%s343 + $0x64] sm:$0xf]
                %372 = vst [vmem:[%s344 + $0x34] sm:$0xf] %v371
                %v373 = vld [vmem:[%s343 + $0x70] sm:$0xf]
                %374 = vst [vmem:[%s344 + $0x38] sm:$0xf] %v373
                %v375 = vld [vmem:[%s343 + $0x74] sm:$0xf]
                %376 = vst [vmem:[%s344 + $0x3c] sm:$0xf] %v375
              $region94: #{patch_merging.1} parent=88 // loop_footer
                %s342 = sadd.s32 1, %s338
              $region95: #{patch_merging.1} parent=88 // loop_footer_branch
                %337 = sbr.rel target = $region91
              $region96: #{patch_merging.1} parent=88 // loop_exit
                _
            $region89: #{patch_merging.1} parent=80 // pred_fallthru
              _
          $region81: #{patch_merging.1} parent=76 // pred_fallthru
            _
          %428 = vnop
        $region77: #{patch_merging.1} parent=31 // pred_fallthru
          _
      $region32: #{patch_merging.1} parent=5 // pred_fallthru
        _
      %p429 = scmp.le.s32.totalorder 1, %s15
      %p430 = scmp.lt.s32.totalorder %s15, 5
      %p431 = pnand %p429, %p430
      %p432 = pneg %p431
      // Predicated region
      $region115: #{patch_merging.1} parent=5 // pred_check
        _
      $region116: #{patch_merging.1} parent=5 // pred_check_branch
        %434 = sbr.rel (%p431) target = $region118
      $region117: #{patch_merging.1} parent=5 // pred_region
        %s435 = ssub.s32 %s15, 1
        %s436 = sand.u32 %s28, 1
        %s437 = sand.u32 %s28, 1
        %s438 = smul.addr %s437, 64
        %s439 = scalar_lea.vmem [#allocation2], %s438
        // Predicated region
        $region119: #{patch_merging.1} parent=117 // pred_check
          %p440 = pneg %p41
        $region120: #{patch_merging.1} parent=117 // pred_check_branch
          %442 = sbr.rel (%p440) target = $region122
        $region121: #{patch_merging.1} parent=117 // pred_region
          _
        $region122: #{patch_merging.1} parent=117 // pred_fallthru
          _
        %s443 = sand.u32 %s54, 1
        %s444 = sand.u32 %s54, 1
        %s445 = smul.addr %s444, 64
        %s446 = scalar_lea.vmem [#allocation3], %s445
        // Predicated region
        $region123: #{patch_merging.1} parent=117 // pred_check
          %p447 = pneg %p67
        $region124: #{patch_merging.1} parent=117 // pred_check_branch
          %449 = sbr.rel (%p447) target = $region126
        $region125: #{patch_merging.1} parent=117 // pred_region
          _
        $region126: #{patch_merging.1} parent=117 // pred_fallthru
          _
        %s450 = sand.u32 %s28, 1
        %s451 = sand.u32 %s28, 1
        %s452 = smul.addr %s451, 64
        %s453 = scalar_lea.vmem [#allocation2], %s452
        %p454 = pneg %p41
        %p455 = pneg %p38
        %s456 = sand.u32 %s54, 1
        %s457 = sand.u32 %s54, 1
        %s458 = smul.addr %s457, 64
        %s459 = scalar_lea.vmem [#allocation3], %s458
        %p460 = pneg %p67
        %p461 = pneg %p64
        %p462 = pneg %p88
        %p463 = pneg %p85
        %p464 = pneg %p109
        %p465 = pneg %p106
        %p466 = pneg %p130
        %p467 = pneg %p127
        %p468 = pneg %p151
        %p469 = pneg %p148
        %p470 = pneg %p177
        %p471 = pneg %p174
        %s472 = sand.u32 %s164, 1
        %s473 = scalar_lea.sflag [#allocation5], %s472
        %s474 = sand.u32 %s164, 1
        %s475 = smul.addr %s474, 64
        %s476 = scalar_lea.vmem [#allocation4], %s475
        %s477 = smul.u32 8, %s20
        %s478 = smul.u32 8, %s20
        %s479 = smul.u32 16, %s20
        %v481 = vld [vmem:[%s439] sm:$0xf]
        %v482 = vld [vmem:[%s439 + $0x4] sm:$0xf]
        %v483 = vld [vmem:[%s439 + $0x8] sm:$0xf]
        %v484 = vld [vmem:[%s439 + $0xc] sm:$0xf]
        %v485 = vld [vmem:[%s439 + $0x10] sm:$0xf]
        %v486 = vld [vmem:[%s439 + $0x14] sm:$0xf]
        %v487 = vld [vmem:[%s439 + $0x18] sm:$0xf]
        %v488 = vld [vmem:[%s439 + $0x1c] sm:$0xf]
        %v489 = vld [vmem:[%s439 + $0x20] sm:$0xf]
        %v490 = vld [vmem:[%s439 + $0x24] sm:$0xf]
        %v491 = vld [vmem:[%s439 + $0x28] sm:$0xf]
        %v492 = vld [vmem:[%s439 + $0x2c] sm:$0xf]
        %v493 = vld [vmem:[%s439 + $0x30] sm:$0xf]
        %v494 = vld [vmem:[%s439 + $0x34] sm:$0xf]
        %v495 = vld [vmem:[%s439 + $0x38] sm:$0xf]
        %v496 = vld [vmem:[%s439 + $0x3c] sm:$0xf]
        %v497 = vld [vmem:[%s446] sm:$0xf]
        %v498 = vld [vmem:[%s446 + $0x4] sm:$0xf]
        %v499 = vld [vmem:[%s446 + $0x8] sm:$0xf]
        %v500 = vld [vmem:[%s446 + $0xc] sm:$0xf]
        %v501 = vld [vmem:[%s446 + $0x10] sm:$0xf]
        %v502 = vld [vmem:[%s446 + $0x14] sm:$0xf]
        %v503 = vld [vmem:[%s446 + $0x18] sm:$0xf]
        %v504 = vld [vmem:[%s446 + $0x1c] sm:$0xf]
        %v505 = vld [vmem:[%s446 + $0x20] sm:$0xf]
        %v506 = vld [vmem:[%s446 + $0x24] sm:$0xf]
        %v507 = vld [vmem:[%s446 + $0x28] sm:$0xf]
        %v508 = vld [vmem:[%s446 + $0x2c] sm:$0xf]
        %v509 = vld [vmem:[%s446 + $0x30] sm:$0xf]
        %v510 = vld [vmem:[%s446 + $0x34] sm:$0xf]
        %v511 = vld [vmem:[%s446 + $0x38] sm:$0xf]
        %v512 = vld [vmem:[%s446 + $0x3c] sm:$0xf]
        %v513 = vunpack.c.l.bf16 %v481
        %v514 = vunpack.c.l.bf16 %v482
        %v515 = vunpack.c.l.bf16 %v483
        %v516 = vunpack.c.l.bf16 %v484
        %v517 = vunpack.c.l.bf16 %v485
        %v518 = vunpack.c.l.bf16 %v486
        %v519 = vunpack.c.l.bf16 %v487
        %v520 = vunpack.c.l.bf16 %v488
        %v521 = vunpack.c.l.bf16 %v489
        %v522 = vunpack.c.l.bf16 %v490
        %v523 = vunpack.c.l.bf16 %v491
        %v524 = vunpack.c.l.bf16 %v492
        %v525 = vunpack.c.l.bf16 %v493
        %v526 = vunpack.c.l.bf16 %v494
        %v527 = vunpack.c.l.bf16 %v495
        %v528 = vunpack.c.l.bf16 %v496
        %v529 = vunpack.c.l.bf16 %v497
        %v530 = vunpack.c.l.bf16 %v498
        %v531 = vunpack.c.l.bf16 %v499
        %v532 = vunpack.c.l.bf16 %v500
        %v533 = vunpack.c.l.bf16 %v501
        %v534 = vunpack.c.l.bf16 %v502
        %v535 = vunpack.c.l.bf16 %v503
        %v536 = vunpack.c.l.bf16 %v504
        %v537 = vunpack.c.l.bf16 %v505
        %v538 = vunpack.c.l.bf16 %v506
        %v539 = vunpack.c.l.bf16 %v507
        %v540 = vunpack.c.l.bf16 %v508
        %v541 = vunpack.c.l.bf16 %v509
        %v542 = vunpack.c.l.bf16 %v510
        %v543 = vunpack.c.l.bf16 %v511
        %v544 = vunpack.c.l.bf16 %v512
        %545 = vadd.xlane.f32.xlu0 %v513
        %v546 = vpop.xlane.xlu0 %545
        %547 = vadd.xlane.f32.xlu0 %v514
        %v548 = vpop.xlane.xlu0 %547
        %549 = vadd.xlane.f32.xlu0 %v515
        %v550 = vpop.xlane.xlu0 %549
        %551 = vadd.xlane.f32.xlu0 %v516
        %v552 = vpop.xlane.xlu0 %551
        %553 = vadd.xlane.f32.xlu0 %v517
        %v554 = vpop.xlane.xlu0 %553
        %555 = vadd.xlane.f32.xlu0 %v518
        %v556 = vpop.xlane.xlu0 %555
        %557 = vadd.xlane.f32.xlu0 %v519
        %v558 = vpop.xlane.xlu0 %557
        %559 = vadd.xlane.f32.xlu0 %v520
        %v560 = vpop.xlane.xlu0 %559
        %561 = vadd.xlane.f32.xlu0 %v521
        %v562 = vpop.xlane.xlu0 %561
        %563 = vadd.xlane.f32.xlu0 %v522
        %v564 = vpop.xlane.xlu0 %563
        %565 = vadd.xlane.f32.xlu0 %v523
        %v566 = vpop.xlane.xlu0 %565
        %567 = vadd.xlane.f32.xlu0 %v524
        %v568 = vpop.xlane.xlu0 %567
        %569 = vadd.xlane.f32.xlu0 %v525
        %v570 = vpop.xlane.xlu0 %569
        %571 = vadd.xlane.f32.xlu0 %v526
        %v572 = vpop.xlane.xlu0 %571
        %573 = vadd.xlane.f32.xlu0 %v527
        %v574 = vpop.xlane.xlu0 %573
        %575 = vadd.xlane.f32.xlu0 %v528
        %v576 = vpop.xlane.xlu0 %575
        %577 = vadd.xlane.f32.xlu0 %v529
        %v578 = vpop.xlane.xlu0 %577
        %579 = vadd.xlane.f32.xlu0 %v530
        %v580 = vpop.xlane.xlu0 %579
        %581 = vadd.xlane.f32.xlu0 %v531
        %v582 = vpop.xlane.xlu0 %581
        %583 = vadd.xlane.f32.xlu0 %v532
        %v584 = vpop.xlane.xlu0 %583
        %585 = vadd.xlane.f32.xlu0 %v533
        %v586 = vpop.xlane.xlu0 %585
        %587 = vadd.xlane.f32.xlu0 %v534
        %v588 = vpop.xlane.xlu0 %587
        %589 = vadd.xlane.f32.xlu0 %v535
        %v590 = vpop.xlane.xlu0 %589
        %591 = vadd.xlane.f32.xlu0 %v536
        %v592 = vpop.xlane.xlu0 %591
        %593 = vadd.xlane.f32.xlu0 %v537
        %v594 = vpop.xlane.xlu0 %593
        %595 = vadd.xlane.f32.xlu0 %v538
        %v596 = vpop.xlane.xlu0 %595
        %597 = vadd.xlane.f32.xlu0 %v539
        %v598 = vpop.xlane.xlu0 %597
        %599 = vadd.xlane.f32.xlu0 %v540
        %v600 = vpop.xlane.xlu0 %599
        %601 = vadd.xlane.f32.xlu0 %v541
        %v602 = vpop.xlane.xlu0 %601
        %603 = vadd.xlane.f32.xlu0 %v542
        %v604 = vpop.xlane.xlu0 %603
        %605 = vadd.xlane.f32.xlu0 %v543
        %v606 = vpop.xlane.xlu0 %605
        %607 = vadd.xlane.f32.xlu0 %v544
        %v608 = vpop.xlane.xlu0 %607
        %v609 = vadd.f32 %v546, %v578
        %v610 = vadd.f32 %v548, %v580
        %v611 = vadd.f32 %v550, %v582
        %v612 = vadd.f32 %v552, %v584
        %v613 = vadd.f32 %v554, %v586
        %v614 = vadd.f32 %v556, %v588
        %v615 = vadd.f32 %v558, %v590
        %v616 = vadd.f32 %v560, %v592
        %v617 = vadd.f32 %v562, %v594
        %v618 = vadd.f32 %v564, %v596
        %v619 = vadd.f32 %v566, %v598
        %v620 = vadd.f32 %v568, %v600
        %v621 = vadd.f32 %v570, %v602
        %v622 = vadd.f32 %v572, %v604
        %v623 = vadd.f32 %v574, %v606
        %v624 = vadd.f32 %v576, %v608
        %v625 = vmul.f32 %v609, 0.00390625
        %v626 = vmul.f32 %v610, 0.00390625
        %v627 = vmul.f32 %v611, 0.00390625
        %v628 = vmul.f32 %v612, 0.00390625
        %v629 = vmul.f32 %v613, 0.00390625
        %v630 = vmul.f32 %v614, 0.00390625
        %v631 = vmul.f32 %v615, 0.00390625
        %v632 = vmul.f32 %v616, 0.00390625
        %v633 = vmul.f32 %v617, 0.00390625
        %v634 = vmul.f32 %v618, 0.00390625
        %v635 = vmul.f32 %v619, 0.00390625
        %v636 = vmul.f32 %v620, 0.00390625
        %v637 = vmul.f32 %v621, 0.00390625
        %v638 = vmul.f32 %v622, 0.00390625
        %v639 = vmul.f32 %v623, 0.00390625
        %v640 = vmul.f32 %v624, 0.00390625
        %v641 = vmul.f32 %v513, %v513
        %v642 = vmul.f32 %v514, %v514
        %v643 = vmul.f32 %v515, %v515
        %v644 = vmul.f32 %v516, %v516
        %v645 = vmul.f32 %v517, %v517
        %v646 = vmul.f32 %v518, %v518
        %v647 = vmul.f32 %v519, %v519
        %v648 = vmul.f32 %v520, %v520
        %v649 = vmul.f32 %v521, %v521
        %v650 = vmul.f32 %v522, %v522
        %v651 = vmul.f32 %v523, %v523
        %v652 = vmul.f32 %v524, %v524
        %v653 = vmul.f32 %v525, %v525
        %v654 = vmul.f32 %v526, %v526
        %v655 = vmul.f32 %v527, %v527
        %v656 = vmul.f32 %v528, %v528
        %657 = vadd.xlane.f32.xlu0 %v641
        %v658 = vpop.xlane.xlu0 %657
        %659 = vadd.xlane.f32.xlu0 %v642
        %v660 = vpop.xlane.xlu0 %659
        %661 = vadd.xlane.f32.xlu0 %v643
        %v662 = vpop.xlane.xlu0 %661
        %663 = vadd.xlane.f32.xlu0 %v644
        %v664 = vpop.xlane.xlu0 %663
        %665 = vadd.xlane.f32.xlu0 %v645
        %v666 = vpop.xlane.xlu0 %665
        %667 = vadd.xlane.f32.xlu0 %v646
        %v668 = vpop.xlane.xlu0 %667
        %669 = vadd.xlane.f32.xlu0 %v647
        %v670 = vpop.xlane.xlu0 %669
        %671 = vadd.xlane.f32.xlu0 %v648
        %v672 = vpop.xlane.xlu0 %671
        %673 = vadd.xlane.f32.xlu0 %v649
        %v674 = vpop.xlane.xlu0 %673
        %675 = vadd.xlane.f32.xlu0 %v650
        %v676 = vpop.xlane.xlu0 %675
        %677 = vadd.xlane.f32.xlu0 %v651
        %v678 = vpop.xlane.xlu0 %677
        %679 = vadd.xlane.f32.xlu0 %v652
        %v680 = vpop.xlane.xlu0 %679
        %681 = vadd.xlane.f32.xlu0 %v653
        %v682 = vpop.xlane.xlu0 %681
        %683 = vadd.xlane.f32.xlu0 %v654
        %v684 = vpop.xlane.xlu0 %683
        %685 = vadd.xlane.f32.xlu0 %v655
        %v686 = vpop.xlane.xlu0 %685
        %687 = vadd.xlane.f32.xlu0 %v656
        %v688 = vpop.xlane.xlu0 %687
        %v689 = vmul.f32 %v529, %v529
        %v690 = vmul.f32 %v530, %v530
        %v691 = vmul.f32 %v531, %v531
        %v692 = vmul.f32 %v532, %v532
        %v693 = vmul.f32 %v533, %v533
        %v694 = vmul.f32 %v534, %v534
        %v695 = vmul.f32 %v535, %v535
        %v696 = vmul.f32 %v536, %v536
        %v697 = vmul.f32 %v537, %v537
        %v698 = vmul.f32 %v538, %v538
        %v699 = vmul.f32 %v539, %v539
        %v700 = vmul.f32 %v540, %v540
        %v701 = vmul.f32 %v541, %v541
        %v702 = vmul.f32 %v542, %v542
        %v703 = vmul.f32 %v543, %v543
        %v704 = vmul.f32 %v544, %v544
        %705 = vadd.xlane.f32.xlu0 %v689
        %v706 = vpop.xlane.xlu0 %705
        %707 = vadd.xlane.f32.xlu0 %v690
        %v708 = vpop.xlane.xlu0 %707
        %709 = vadd.xlane.f32.xlu0 %v691
        %v710 = vpop.xlane.xlu0 %709
        %711 = vadd.xlane.f32.xlu0 %v692
        %v712 = vpop.xlane.xlu0 %711
        %713 = vadd.xlane.f32.xlu0 %v693
        %v714 = vpop.xlane.xlu0 %713
        %715 = vadd.xlane.f32.xlu0 %v694
        %v716 = vpop.xlane.xlu0 %715
        %717 = vadd.xlane.f32.xlu0 %v695
        %v718 = vpop.xlane.xlu0 %717
        %719 = vadd.xlane.f32.xlu0 %v696
        %v720 = vpop.xlane.xlu0 %719
        %721 = vadd.xlane.f32.xlu0 %v697
        %v722 = vpop.xlane.xlu0 %721
        %723 = vadd.xlane.f32.xlu0 %v698
        %v724 = vpop.xlane.xlu0 %723
        %725 = vadd.xlane.f32.xlu0 %v699
        %v726 = vpop.xlane.xlu0 %725
        %727 = vadd.xlane.f32.xlu0 %v700
        %v728 = vpop.xlane.xlu0 %727
        %729 = vadd.xlane.f32.xlu0 %v701
        %v730 = vpop.xlane.xlu0 %729
        %731 = vadd.xlane.f32.xlu0 %v702
        %v732 = vpop.xlane.xlu0 %731
        %733 = vadd.xlane.f32.xlu0 %v703
        %v734 = vpop.xlane.xlu0 %733
        %735 = vadd.xlane.f32.xlu0 %v704
        %v736 = vpop.xlane.xlu0 %735
        %v737 = vadd.f32 %v658, %v706
        %v738 = vadd.f32 %v660, %v708
        %v739 = vadd.f32 %v662, %v710
        %v740 = vadd.f32 %v664, %v712
        %v741 = vadd.f32 %v666, %v714
        %v742 = vadd.f32 %v668, %v716
        %v743 = vadd.f32 %v670, %v718
        %v744 = vadd.f32 %v672, %v720
        %v745 = vadd.f32 %v674, %v722
        %v746 = vadd.f32 %v676, %v724
        %v747 = vadd.f32 %v678, %v726
        %v748 = vadd.f32 %v680, %v728
        %v749 = vadd.f32 %v682, %v730
        %v750 = vadd.f32 %v684, %v732
        %v751 = vadd.f32 %v686, %v734
        %v752 = vadd.f32 %v688, %v736
        %v753 = vmul.f32 %v737, 0.00390625
        %v754 = vmul.f32 %v738, 0.00390625
        %v755 = vmul.f32 %v739, 0.00390625
        %v756 = vmul.f32 %v740, 0.00390625
        %v757 = vmul.f32 %v741, 0.00390625
        %v758 = vmul.f32 %v742, 0.00390625
        %v759 = vmul.f32 %v743, 0.00390625
        %v760 = vmul.f32 %v744, 0.00390625
        %v761 = vmul.f32 %v745, 0.00390625
        %v762 = vmul.f32 %v746, 0.00390625
        %v763 = vmul.f32 %v747, 0.00390625
        %v764 = vmul.f32 %v748, 0.00390625
        %v765 = vmul.f32 %v749, 0.00390625
        %v766 = vmul.f32 %v750, 0.00390625
        %v767 = vmul.f32 %v751, 0.00390625
        %v768 = vmul.f32 %v752, 0.00390625
        %v769 = vmul.f32 %v625, %v625
        %v770 = vmul.f32 %v626, %v626
        %v771 = vmul.f32 %v627, %v627
        %v772 = vmul.f32 %v628, %v628
        %v773 = vmul.f32 %v629, %v629
        %v774 = vmul.f32 %v630, %v630
        %v775 = vmul.f32 %v631, %v631
        %v776 = vmul.f32 %v632, %v632
        %v777 = vmul.f32 %v633, %v633
        %v778 = vmul.f32 %v634, %v634
        %v779 = vmul.f32 %v635, %v635
        %v780 = vmul.f32 %v636, %v636
        %v781 = vmul.f32 %v637, %v637
        %v782 = vmul.f32 %v638, %v638
        %v783 = vmul.f32 %v639, %v639
        %v784 = vmul.f32 %v640, %v640
        %v785 = vsub.f32 %v753, %v769
        %v786 = vsub.f32 %v754, %v770
        %v787 = vsub.f32 %v755, %v771
        %v788 = vsub.f32 %v756, %v772
        %v789 = vsub.f32 %v757, %v773
        %v790 = vsub.f32 %v758, %v774
        %v791 = vsub.f32 %v759, %v775
        %v792 = vsub.f32 %v760, %v776
        %v793 = vsub.f32 %v761, %v777
        %v794 = vsub.f32 %v762, %v778
        %v795 = vsub.f32 %v763, %v779
        %v796 = vsub.f32 %v764, %v780
        %v797 = vsub.f32 %v765, %v781
        %v798 = vsub.f32 %v766, %v782
        %v799 = vsub.f32 %v767, %v783
        %v800 = vsub.f32 %v768, %v784
        %v801 = vadd.f32 %v785, 1e-05
        %v802 = vadd.f32 %v786, 1e-05
        %v803 = vadd.f32 %v787, 1e-05
        %v804 = vadd.f32 %v788, 1e-05
        %v805 = vadd.f32 %v789, 1e-05
        %v806 = vadd.f32 %v790, 1e-05
        %v807 = vadd.f32 %v791, 1e-05
        %v808 = vadd.f32 %v792, 1e-05
        %v809 = vadd.f32 %v793, 1e-05
        %v810 = vadd.f32 %v794, 1e-05
        %v811 = vadd.f32 %v795, 1e-05
        %v812 = vadd.f32 %v796, 1e-05
        %v813 = vadd.f32 %v797, 1e-05
        %v814 = vadd.f32 %v798, 1e-05
        %v815 = vadd.f32 %v799, 1e-05
        %v816 = vadd.f32 %v800, 1e-05
        %v817 = vrsqrt.pop %v801
        %v818 = vrsqrt.pop %v802
        %v819 = vrsqrt.pop %v803
        %v820 = vrsqrt.pop %v804
        %v821 = vrsqrt.pop %v805
        %v822 = vrsqrt.pop %v806
        %v823 = vrsqrt.pop %v807
        %v824 = vrsqrt.pop %v808
        %v825 = vrsqrt.pop %v809
        %v826 = vrsqrt.pop %v810
        %v827 = vrsqrt.pop %v811
        %v828 = vrsqrt.pop %v812
        %v829 = vrsqrt.pop %v813
        %v830 = vrsqrt.pop %v814
        %v831 = vrsqrt.pop %v815
        %v832 = vrsqrt.pop %v816
        %v833 = vld [vmem:[%s2] sm:$0xf]
        %v834 = vld [vmem:[%s2 + $0x4] sm:$0xf]
        %v835 = vld [vmem:[%s2 + $0x8] sm:$0xf]
        %v836 = vld [vmem:[%s2 + $0xc] sm:$0xf]
        %v837 = vld [vmem:[%s2 + $0x10] sm:$0xf]
        %v838 = vld [vmem:[%s2 + $0x14] sm:$0xf]
        %v839 = vld [vmem:[%s2 + $0x18] sm:$0xf]
        %v840 = vld [vmem:[%s2 + $0x1c] sm:$0xf]
        %v841 = vld [vmem:[%s2 + $0x20] sm:$0xf]
        %v842 = vld [vmem:[%s2 + $0x24] sm:$0xf]
        %v843 = vld [vmem:[%s2 + $0x28] sm:$0xf]
        %v844 = vld [vmem:[%s2 + $0x2c] sm:$0xf]
        %v845 = vld [vmem:[%s2 + $0x30] sm:$0xf]
        %v846 = vld [vmem:[%s2 + $0x34] sm:$0xf]
        %v847 = vld [vmem:[%s2 + $0x38] sm:$0xf]
        %v848 = vld [vmem:[%s2 + $0x3c] sm:$0xf]
        %v849 = vld [vmem:[%s3] sm:$0xf]
        %v850 = vld [vmem:[%s3 + $0x4] sm:$0xf]
        %v851 = vld [vmem:[%s3 + $0x8] sm:$0xf]
        %v852 = vld [vmem:[%s3 + $0xc] sm:$0xf]
        %v853 = vld [vmem:[%s3 + $0x10] sm:$0xf]
        %v854 = vld [vmem:[%s3 + $0x14] sm:$0xf]
        %v855 = vld [vmem:[%s3 + $0x18] sm:$0xf]
        %v856 = vld [vmem:[%s3 + $0x1c] sm:$0xf]
        %v857 = vld [vmem:[%s3 + $0x20] sm:$0xf]
        %v858 = vld [vmem:[%s3 + $0x24] sm:$0xf]
        %v859 = vld [vmem:[%s3 + $0x28] sm:$0xf]
        %v860 = vld [vmem:[%s3 + $0x2c] sm:$0xf]
        %v861 = vld [vmem:[%s3 + $0x30] sm:$0xf]
        %v862 = vld [vmem:[%s3 + $0x34] sm:$0xf]
        %v863 = vld [vmem:[%s3 + $0x38] sm:$0xf]
        %v864 = vld [vmem:[%s3 + $0x3c] sm:$0xf]
        %v881 = vunpack.c.l.b16 %v497
        %v882 = vunpack.c.l.b16 %v498
        %v883 = vunpack.c.l.b16 %v499
        %v884 = vunpack.c.l.b16 %v500
        %v885 = vunpack.c.l.b16 %v501
        %v886 = vunpack.c.l.b16 %v502
        %v887 = vunpack.c.l.b16 %v503
        %v888 = vunpack.c.l.b16 %v504
        %v889 = vunpack.c.l.b16 %v505
        %v890 = vunpack.c.l.b16 %v506
        %v891 = vunpack.c.l.b16 %v507
        %v892 = vunpack.c.l.b16 %v508
        %v893 = vunpack.c.l.b16 %v509
        %v894 = vunpack.c.l.b16 %v510
        %v895 = vunpack.c.l.b16 %v511
        %v896 = vunpack.c.l.b16 %v512
        %v897 = vpack.c.b16 %v882, %v881
        %v898 = vpack.c.b16 %v884, %v883
        %v899 = vpack.c.b16 %v886, %v885
        %v900 = vpack.c.b16 %v888, %v887
        %v901 = vpack.c.b16 %v890, %v889
        %v902 = vpack.c.b16 %v892, %v891
        %v903 = vpack.c.b16 %v894, %v893
        %v904 = vpack.c.b16 %v896, %v895
        %v929 = vunpack.c.l.b16 %v849
        %v930 = vunpack.c.l.b16 %v850
        %v931 = vunpack.c.l.b16 %v851
        %v932 = vunpack.c.l.b16 %v852
        %v933 = vunpack.c.l.b16 %v853
        %v934 = vunpack.c.l.b16 %v854
        %v935 = vunpack.c.l.b16 %v855
        %v936 = vunpack.c.l.b16 %v856
        %v937 = vunpack.c.l.b16 %v857
        %v938 = vunpack.c.l.b16 %v858
        %v939 = vunpack.c.l.b16 %v859
        %v940 = vunpack.c.l.b16 %v860
        %v941 = vunpack.c.l.b16 %v861
        %v942 = vunpack.c.l.b16 %v862
        %v943 = vunpack.c.l.b16 %v863
        %v944 = vunpack.c.l.b16 %v864
        %v945 = vpack.c.b16 %v930, %v929
        %v946 = vpack.c.b16 %v932, %v931
        %v947 = vpack.c.b16 %v934, %v933
        %v948 = vpack.c.b16 %v936, %v935
        %v949 = vpack.c.b16 %v938, %v937
        %v950 = vpack.c.b16 %v940, %v939
        %v951 = vpack.c.b16 %v942, %v941
        %v952 = vpack.c.b16 %v944, %v943
        %961 = vmatprep.subr.bf16.mxu0 0
        %962 = vmatpush1.bf16.msra.mxu0 %v945
        %963 = vmatprep.subr.bf16.mxu0 0
        %964 = vmatpush1.bf16.msra.mxu0 %v946
        %965 = vmatprep.subr.bf16.mxu0 0
        %966 = vmatpush1.bf16.msra.mxu0 %v947
        %967 = vmatprep.subr.bf16.mxu0 0
        %968 = vmatpush1.bf16.msra.mxu0 %v948
        %969 = vmatprep.subr.bf16.mxu0 0
        %970 = vmatpush1.bf16.msra.mxu0 %v949
        %971 = vmatprep.subr.bf16.mxu0 0
        %972 = vmatpush1.bf16.msra.mxu0 %v950
        %973 = vmatprep.subr.bf16.mxu0 0
        %974 = vmatpush1.bf16.msra.mxu0 %v951
        %975 = vmatprep.subr.bf16.mxu0 0
        %976 = vmatpush1.bf16.msra.mxu0 %v952
        %977 = vmatprep.subr.bf16.mxu0 0
        %978 = vmatpush1.bf16.msra.mxu0 0
        %979 = vmatprep.subr.bf16.mxu0 0
        %980 = vmatpush1.bf16.msra.mxu0 0
        %981 = vmatprep.subr.bf16.mxu0 0
        %982 = vmatpush1.bf16.msra.mxu0 0
        %983 = vmatprep.subr.bf16.mxu0 0
        %984 = vmatpush1.bf16.msra.mxu0 0
        %985 = vmatprep.subr.bf16.mxu0 0
        %986 = vmatpush1.bf16.msra.mxu0 0
        %987 = vmatprep.subr.bf16.mxu0 0
        %988 = vmatpush1.bf16.msra.mxu0 0
        %989 = vmatprep.subr.bf16.mxu0 0
        %990 = vmatpush1.bf16.msra.mxu0 0
        %991 = vmatprep.subr.bf16.mxu0 0
        %992 = vmatpush1.bf16.msra.mxu0 0
        %993 = vmatprep.mubr.bf16.mxu0 0
        %994 = vmatmul.mubr.bf16.gmra.mrb[0].mxu0 %v897
        %v995 = vpop.f32.mrb[0].mxu0
        %v996 = vadd.f32 0.0, %v995
        %v997 = vpop.f32.mrb[0].mxu0
        %v998 = vpop.f32.mrb[0].mxu0
        %v999 = vadd.f32 0.0, %v998
        %v1000 = vpop.f32.mrb[0].mxu0
        %1001 = vmatprep.mubr.bf16.mxu0 0
        %1002 = vmatmul.mubr.bf16.gmra.mrb[0].mxu0 %v898
        %v1003 = vpop.f32.mrb[0].mxu0
        %v1004 = vadd.f32 0.0, %v1003
        %v1005 = vpop.f32.mrb[0].mxu0
        %v1006 = vpop.f32.mrb[0].mxu0
        %v1007 = vadd.f32 0.0, %v1006
        %v1008 = vpop.f32.mrb[0].mxu0
        %1009 = vmatprep.mubr.bf16.mxu0 0
        %1010 = vmatmul.mubr.bf16.gmra.mrb[0].mxu0 %v899
        %v1011 = vpop.f32.mrb[0].mxu0
        %v1012 = vadd.f32 0.0, %v1011
        %v1013 = vpop.f32.mrb[0].mxu0
        %v1014 = vpop.f32.mrb[0].mxu0
        %v1015 = vadd.f32 0.0, %v1014
        %v1016 = vpop.f32.mrb[0].mxu0
        %1017 = vmatprep.mubr.bf16.mxu0 0
        %1018 = vmatmul.mubr.bf16.gmra.mrb[0].mxu0 %v900
        %v1019 = vpop.f32.mrb[0].mxu0
        %v1020 = vadd.f32 0.0, %v1019
        %v1021 = vpop.f32.mrb[0].mxu0
        %v1022 = vpop.f32.mrb[0].mxu0
        %v1023 = vadd.f32 0.0, %v1022
        %v1024 = vpop.f32.mrb[0].mxu0
        %1025 = vmatprep.mubr.bf16.mxu0 0
        %1026 = vmatmul.mubr.bf16.gmra.mrb[0].mxu0 %v901
        %v1027 = vpop.f32.mrb[0].mxu0
        %v1028 = vadd.f32 0.0, %v1027
        %v1029 = vpop.f32.mrb[0].mxu0
        %v1030 = vpop.f32.mrb[0].mxu0
        %v1031 = vadd.f32 0.0, %v1030
        %v1032 = vpop.f32.mrb[0].mxu0
        %1033 = vmatprep.mubr.bf16.mxu0 0
        %1034 = vmatmul.mubr.bf16.gmra.mrb[0].mxu0 %v902
        %v1035 = vpop.f32.mrb[0].mxu0
        %v1036 = vadd.f32 0.0, %v1035
        %v1037 = vpop.f32.mrb[0].mxu0
        %v1038 = vpop.f32.mrb[0].mxu0
        %v1039 = vadd.f32 0.0, %v1038
        %v1040 = vpop.f32.mrb[0].mxu0
        %1041 = vmatprep.mubr.bf16.mxu0 0
        %1042 = vmatmul.mubr.bf16.gmra.mrb[0].mxu0 %v903
        %v1043 = vpop.f32.mrb[0].mxu0
        %v1044 = vadd.f32 0.0, %v1043
        %v1045 = vpop.f32.mrb[0].mxu0
        %v1046 = vpop.f32.mrb[0].mxu0
        %v1047 = vadd.f32 0.0, %v1046
        %v1048 = vpop.f32.mrb[0].mxu0
        %1049 = vmatprep.mubr.bf16.mxu0 0
        %1050 = vmatmul.mubr.bf16.gmra.mrb[0].mxu0 %v904
        %v1051 = vpop.f32.mrb[0].mxu0
        %v1052 = vadd.f32 0.0, %v1051
        %v1053 = vpop.f32.mrb[0].mxu0
        %v1054 = vpop.f32.mrb[0].mxu0
        %v1055 = vadd.f32 0.0, %v1054
        %v1056 = vpop.f32.mrb[0].mxu0
        %1057 = vdwg.mxu0
        %v1074 = vunpack.c.l.b16 %v481
        %v1075 = vunpack.c.l.b16 %v482
        %v1076 = vunpack.c.l.b16 %v483
        %v1077 = vunpack.c.l.b16 %v484
        %v1078 = vunpack.c.l.b16 %v485
        %v1079 = vunpack.c.l.b16 %v486
        %v1080 = vunpack.c.l.b16 %v487
        %v1081 = vunpack.c.l.b16 %v488
        %v1082 = vunpack.c.l.b16 %v489
        %v1083 = vunpack.c.l.b16 %v490
        %v1084 = vunpack.c.l.b16 %v491
        %v1085 = vunpack.c.l.b16 %v492
        %v1086 = vunpack.c.l.b16 %v493
        %v1087 = vunpack.c.l.b16 %v494
        %v1088 = vunpack.c.l.b16 %v495
        %v1089 = vunpack.c.l.b16 %v496
        %v1090 = vpack.c.b16 %v1075, %v1074
        %v1091 = vpack.c.b16 %v1077, %v1076
        %v1092 = vpack.c.b16 %v1079, %v1078
        %v1093 = vpack.c.b16 %v1081, %v1080
        %v1094 = vpack.c.b16 %v1083, %v1082
        %v1095 = vpack.c.b16 %v1085, %v1084
        %v1096 = vpack.c.b16 %v1087, %v1086
        %v1097 = vpack.c.b16 %v1089, %v1088
        %v1122 = vunpack.c.l.b16 %v833
        %v1123 = vunpack.c.l.b16 %v834
        %v1124 = vunpack.c.l.b16 %v835
        %v1125 = vunpack.c.l.b16 %v836
        %v1126 = vunpack.c.l.b16 %v837
        %v1127 = vunpack.c.l.b16 %v838
        %v1128 = vunpack.c.l.b16 %v839
        %v1129 = vunpack.c.l.b16 %v840
        %v1130 = vunpack.c.l.b16 %v841
        %v1131 = vunpack.c.l.b16 %v842
        %v1132 = vunpack.c.l.b16 %v843
        %v1133 = vunpack.c.l.b16 %v844
        %v1134 = vunpack.c.l.b16 %v845
        %v1135 = vunpack.c.l.b16 %v846
        %v1136 = vunpack.c.l.b16 %v847
        %v1137 = vunpack.c.l.b16 %v848
        %v1138 = vpack.c.b16 %v1123, %v1122
        %v1139 = vpack.c.b16 %v1125, %v1124
        %v1140 = vpack.c.b16 %v1127, %v1126
        %v1141 = vpack.c.b16 %v1129, %v1128
        %v1142 = vpack.c.b16 %v1131, %v1130
        %v1143 = vpack.c.b16 %v1133, %v1132
        %v1144 = vpack.c.b16 %v1135, %v1134
        %v1145 = vpack.c.b16 %v1137, %v1136
        %1154 = vmatprep.subr.bf16.mxu0 0
        %1155 = vmatpush1.bf16.msra.mxu0 %v1138
        %1156 = vmatprep.subr.bf16.mxu0 0
        %1157 = vmatpush1.bf16.msra.mxu0 %v1139
        %1158 = vmatprep.subr.bf16.mxu0 0
        %1159 = vmatpush1.bf16.msra.mxu0 %v1140
        %1160 = vmatprep.subr.bf16.mxu0 0
        %1161 = vmatpush1.bf16.msra.mxu0 %v1141
        %1162 = vmatprep.subr.bf16.mxu0 0
        %1163 = vmatpush1.bf16.msra.mxu0 %v1142
        %1164 = vmatprep.subr.bf16.mxu0 0
        %1165 = vmatpush1.bf16.msra.mxu0 %v1143
        %1166 = vmatprep.subr.bf16.mxu0 0
        %1167 = vmatpush1.bf16.msra.mxu0 %v1144
        %1168 = vmatprep.subr.bf16.mxu0 0
        %1169 = vmatpush1.bf16.msra.mxu0 %v1145
        %1170 = vmatprep.subr.bf16.mxu0 0
        %1171 = vmatpush1.bf16.msra.mxu0 0
        %1172 = vmatprep.subr.bf16.mxu0 0
        %1173 = vmatpush1.bf16.msra.mxu0 0
        %1174 = vmatprep.subr.bf16.mxu0 0
        %1175 = vmatpush1.bf16.msra.mxu0 0
        %1176 = vmatprep.subr.bf16.mxu0 0
        %1177 = vmatpush1.bf16.msra.mxu0 0
        %1178 = vmatprep.subr.bf16.mxu0 0
        %1179 = vmatpush1.bf16.msra.mxu0 0
        %1180 = vmatprep.subr.bf16.mxu0 0
        %1181 = vmatpush1.bf16.msra.mxu0 0
        %1182 = vmatprep.subr.bf16.mxu0 0
        %1183 = vmatpush1.bf16.msra.mxu0 0
        %1184 = vmatprep.subr.bf16.mxu0 0
        %1185 = vmatpush1.bf16.msra.mxu0 0
        %1186 = vmatprep.mubr.bf16.mxu0 0
        %1187 = vmatmul.mubr.bf16.gmra.mrb[0].mxu0 %v1090
        %v1188 = vpop.f32.mrb[0].mxu0
        %v1189 = vadd.f32 %v996, %v1188
        %v1190 = vpop.f32.mrb[0].mxu0
        %v1191 = vpop.f32.mrb[0].mxu0
        %v1192 = vadd.f32 %v999, %v1191
        %v1193 = vpop.f32.mrb[0].mxu0
        %1194 = vmatprep.mubr.bf16.mxu0 0
        %1195 = vmatmul.mubr.bf16.gmra.mrb[0].mxu0 %v1091
        %v1196 = vpop.f32.mrb[0].mxu0
        %v1197 = vadd.f32 %v1004, %v1196
        %v1198 = vpop.f32.mrb[0].mxu0
        %v1199 = vpop.f32.mrb[0].mxu0
        %v1200 = vadd.f32 %v1007, %v1199
        %v1201 = vpop.f32.mrb[0].mxu0
        %1202 = vmatprep.mubr.bf16.mxu0 0
        %1203 = vmatmul.mubr.bf16.gmra.mrb[0].mxu0 %v1092
        %v1204 = vpop.f32.mrb[0].mxu0
        %v1205 = vadd.f32 %v1012, %v1204
        %v1206 = vpop.f32.mrb[0].mxu0
        %v1207 = vpop.f32.mrb[0].mxu0
        %v1208 = vadd.f32 %v1015, %v1207
        %v1209 = vpop.f32.mrb[0].mxu0
        %1210 = vmatprep.mubr.bf16.mxu0 0
        %1211 = vmatmul.mubr.bf16.gmra.mrb[0].mxu0 %v1093
        %v1212 = vpop.f32.mrb[0].mxu0
        %v1213 = vadd.f32 %v1020, %v1212
        %v1214 = vpop.f32.mrb[0].mxu0
        %v1215 = vpop.f32.mrb[0].mxu0
        %v1216 = vadd.f32 %v1023, %v1215
        %v1217 = vpop.f32.mrb[0].mxu0
        %1218 = vmatprep.mubr.bf16.mxu0 0
        %1219 = vmatmul.mubr.bf16.gmra.mrb[0].mxu0 %v1094
        %v1220 = vpop.f32.mrb[0].mxu0
        %v1221 = vadd.f32 %v1028, %v1220
        %v1222 = vpop.f32.mrb[0].mxu0
        %v1223 = vpop.f32.mrb[0].mxu0
        %v1224 = vadd.f32 %v1031, %v1223
        %v1225 = vpop.f32.mrb[0].mxu0
        %1226 = vmatprep.mubr.bf16.mxu0 0
        %1227 = vmatmul.mubr.bf16.gmra.mrb[0].mxu0 %v1095
        %v1228 = vpop.f32.mrb[0].mxu0
        %v1229 = vadd.f32 %v1036, %v1228
        %v1230 = vpop.f32.mrb[0].mxu0
        %v1231 = vpop.f32.mrb[0].mxu0
        %v1232 = vadd.f32 %v1039, %v1231
        %v1233 = vpop.f32.mrb[0].mxu0
        %1234 = vmatprep.mubr.bf16.mxu0 0
        %1235 = vmatmul.mubr.bf16.gmra.mrb[0].mxu0 %v1096
        %v1236 = vpop.f32.mrb[0].mxu0
        %v1237 = vadd.f32 %v1044, %v1236
        %v1238 = vpop.f32.mrb[0].mxu0
        %v1239 = vpop.f32.mrb[0].mxu0
        %v1240 = vadd.f32 %v1047, %v1239
        %v1241 = vpop.f32.mrb[0].mxu0
        %1242 = vmatprep.mubr.bf16.mxu0 0
        %1243 = vmatmul.mubr.bf16.gmra.mrb[0].mxu0 %v1097
        %v1244 = vpop.f32.mrb[0].mxu0
        %v1245 = vadd.f32 %v1052, %v1244
        %v1246 = vpop.f32.mrb[0].mxu0
        %v1247 = vpop.f32.mrb[0].mxu0
        %v1248 = vadd.f32 %v1055, %v1247
        %v1249 = vpop.f32.mrb[0].mxu0
        %1250 = vdwg.mxu0
        %v1251 = vld [vmem:[%s5] sm:$0x1]
        %v1253 = vlaneseq
        %v1254 = vshrl.u32 %v1253, 7
        %v1255 = vsub.s32 0, %v1254
        %v1256 = vrot.slane %v1251, %v1255
        %v1258 = vmul.f32 %v625, %v1256
        %v1259 = vmul.f32 %v626, %v1256
        %v1260 = vmul.f32 %v627, %v1256
        %v1261 = vmul.f32 %v628, %v1256
        %v1262 = vmul.f32 %v629, %v1256
        %v1263 = vmul.f32 %v630, %v1256
        %v1264 = vmul.f32 %v631, %v1256
        %v1265 = vmul.f32 %v632, %v1256
        %v1266 = vmul.f32 %v633, %v1256
        %v1267 = vmul.f32 %v634, %v1256
        %v1268 = vmul.f32 %v635, %v1256
        %v1269 = vmul.f32 %v636, %v1256
        %v1270 = vmul.f32 %v637, %v1256
        %v1271 = vmul.f32 %v638, %v1256
        %v1272 = vmul.f32 %v639, %v1256
        %v1273 = vmul.f32 %v640, %v1256
        %v1274 = vsub.f32 %v1189, %v1258
        %v1275 = vsub.f32 %v1192, %v1259
        %v1276 = vsub.f32 %v1197, %v1260
        %v1277 = vsub.f32 %v1200, %v1261
        %v1278 = vsub.f32 %v1205, %v1262
        %v1279 = vsub.f32 %v1208, %v1263
        %v1280 = vsub.f32 %v1213, %v1264
        %v1281 = vsub.f32 %v1216, %v1265
        %v1282 = vsub.f32 %v1221, %v1266
        %v1283 = vsub.f32 %v1224, %v1267
        %v1284 = vsub.f32 %v1229, %v1268
        %v1285 = vsub.f32 %v1232, %v1269
        %v1286 = vsub.f32 %v1237, %v1270
        %v1287 = vsub.f32 %v1240, %v1271
        %v1288 = vsub.f32 %v1245, %v1272
        %v1289 = vsub.f32 %v1248, %v1273
        %v1290 = vmul.f32 %v817, %v1274
        %v1291 = vmul.f32 %v818, %v1275
        %v1292 = vmul.f32 %v819, %v1276
        %v1293 = vmul.f32 %v820, %v1277
        %v1294 = vmul.f32 %v821, %v1278
        %v1295 = vmul.f32 %v822, %v1279
        %v1296 = vmul.f32 %v823, %v1280
        %v1297 = vmul.f32 %v824, %v1281
        %v1298 = vmul.f32 %v825, %v1282
        %v1299 = vmul.f32 %v826, %v1283
        %v1300 = vmul.f32 %v827, %v1284
        %v1301 = vmul.f32 %v828, %v1285
        %v1302 = vmul.f32 %v829, %v1286
        %v1303 = vmul.f32 %v830, %v1287
        %v1304 = vmul.f32 %v831, %v1288
        %v1305 = vmul.f32 %v832, %v1289
        %v1306 = vld [vmem:[%s4] sm:$0x1]
        %v1308 = vlaneseq
        %v1309 = vshrl.u32 %v1308, 7
        %v1310 = vsub.s32 0, %v1309
        %v1311 = vrot.slane %v1306, %v1310
        %v1313 = vadd.f32 %v1290, %v1311
        %v1314 = vadd.f32 %v1291, %v1311
        %v1315 = vadd.f32 %v1292, %v1311
        %v1316 = vadd.f32 %v1293, %v1311
        %v1317 = vadd.f32 %v1294, %v1311
        %v1318 = vadd.f32 %v1295, %v1311
        %v1319 = vadd.f32 %v1296, %v1311
        %v1320 = vadd.f32 %v1297, %v1311
        %v1321 = vadd.f32 %v1298, %v1311
        %v1322 = vadd.f32 %v1299, %v1311
        %v1323 = vadd.f32 %v1300, %v1311
        %v1324 = vadd.f32 %v1301, %v1311
        %v1325 = vadd.f32 %v1302, %v1311
        %v1326 = vadd.f32 %v1303, %v1311
        %v1327 = vadd.f32 %v1304, %v1311
        %v1328 = vadd.f32 %v1305, %v1311
        %v1329 = vpack.c.bf16 %v1314, %v1313
        %v1330 = vpack.c.bf16 %v1316, %v1315
        %v1331 = vpack.c.bf16 %v1318, %v1317
        %v1332 = vpack.c.bf16 %v1320, %v1319
        %v1333 = vpack.c.bf16 %v1322, %v1321
        %v1334 = vpack.c.bf16 %v1324, %v1323
        %v1335 = vpack.c.bf16 %v1326, %v1325
        %v1336 = vpack.c.bf16 %v1328, %v1327
        %v1345 = vunpack.c.l.b16 %v1329
        %v1346 = vunpack.c.h.b16 %v1329
        %v1347 = vunpack.c.l.b16 %v1330
        %v1348 = vunpack.c.h.b16 %v1330
        %v1349 = vunpack.c.l.b16 %v1331
        %v1350 = vunpack.c.h.b16 %v1331
        %v1351 = vunpack.c.l.b16 %v1332
        %v1352 = vunpack.c.h.b16 %v1332
        %v1353 = vunpack.c.l.b16 %v1333
        %v1354 = vunpack.c.h.b16 %v1333
        %v1355 = vunpack.c.l.b16 %v1334
        %v1356 = vunpack.c.h.b16 %v1334
        %v1357 = vunpack.c.l.b16 %v1335
        %v1358 = vunpack.c.h.b16 %v1335
        %v1359 = vunpack.c.l.b16 %v1336
        %v1360 = vunpack.c.h.b16 %v1336
        %v1361 = vpack.c.b16 %v1345, %v1345
        %v1362 = vpack.c.b16 %v1346, %v1346
        %v1363 = vpack.c.b16 %v1347, %v1347
        %v1364 = vpack.c.b16 %v1348, %v1348
        %v1365 = vpack.c.b16 %v1349, %v1349
        %v1366 = vpack.c.b16 %v1350, %v1350
        %v1367 = vpack.c.b16 %v1351, %v1351
        %v1368 = vpack.c.b16 %v1352, %v1352
        %v1369 = vpack.c.b16 %v1353, %v1353
        %v1370 = vpack.c.b16 %v1354, %v1354
        %v1371 = vpack.c.b16 %v1355, %v1355
        %v1372 = vpack.c.b16 %v1356, %v1356
        %v1373 = vpack.c.b16 %v1357, %v1357
        %v1374 = vpack.c.b16 %v1358, %v1358
        %v1375 = vpack.c.b16 %v1359, %v1359
        %v1376 = vpack.c.b16 %v1360, %v1360
        %1393 = vst [vmem:[%s476] sm:$0xf] %v1361
        %1394 = vst [vmem:[%s476 + $0x4] sm:$0xf] %v1362
        %1395 = vst [vmem:[%s476 + $0x8] sm:$0xf] %v1363
        %1396 = vst [vmem:[%s476 + $0xc] sm:$0xf] %v1364
        %1397 = vst [vmem:[%s476 + $0x10] sm:$0xf] %v1365
        %1398 = vst [vmem:[%s476 + $0x14] sm:$0xf] %v1366
        %1399 = vst [vmem:[%s476 + $0x18] sm:$0xf] %v1367
        %1400 = vst [vmem:[%s476 + $0x1c] sm:$0xf] %v1368
        %1401 = vst [vmem:[%s476 + $0x20] sm:$0xf] %v1369
        %1402 = vst [vmem:[%s476 + $0x24] sm:$0xf] %v1370
        %1403 = vst [vmem:[%s476 + $0x28] sm:$0xf] %v1371
        %1404 = vst [vmem:[%s476 + $0x2c] sm:$0xf] %v1372
        %1405 = vst [vmem:[%s476 + $0x30] sm:$0xf] %v1373
        %1406 = vst [vmem:[%s476 + $0x34] sm:$0xf] %v1374
        %1407 = vst [vmem:[%s476 + $0x38] sm:$0xf] %v1375
        %1408 = vst [vmem:[%s476 + $0x3c] sm:$0xf] %v1376
        %s1409 = sand.u32 %s164, 1
        %s1410 = scalar_lea.sflag [#allocation5], %s1409
        %s1411 = sand.u32 %s164, 1
        %s1412 = smul.addr %s1411, 64
        %s1413 = scalar_lea.vmem [#allocation4], %s1412
        // Predicated region
        $region127: #{patch_merging.1} parent=117 // pred_check
          %p1414 = pneg %p174
        $region128: #{patch_merging.1} parent=117 // pred_check_branch
          %1416 = sbr.rel (%p1414) target = $region130
        $region129: #{patch_merging.1} parent=117 // pred_region
          %s1417 = smul.u32 16, %s20
          %s1419 = ssub.s32 1024, 1024
          %1420 = vsyncadd %s1410, %s1419
          %s1421 = smul.addr %s1417, 64
          %s1422 = scalar_lea.hbm %s6, %s1421
          %s1423 = sshll.u32 %s1413, 4
          %s1424 = int_to_ptr.vmem [resolvable:$true] %s1423
          %1429 = dma.vmem_to_hbm [thread:$0]  %s1424, 1024, %s1422, %s1410, 64, 64, 4
        $region130: #{patch_merging.1} parent=117 // pred_fallthru
          _
      $region118: #{patch_merging.1} parent=5 // pred_fallthru
        _
      %p1430 = scmp.le.s32.totalorder 2, %s15
      // Predicated region
      $region131: #{patch_merging.1} parent=5 // pred_check
        %p1431 = pneg %p1430
      $region132: #{patch_merging.1} parent=5 // pred_check_branch
        %1433 = sbr.rel (%p1431) target = $region134
      $region133: #{patch_merging.1} parent=5 // pred_region
        %s1434 = ssub.s32 %s15, 2
        // Predicated region
        $region135: #{patch_merging.1} parent=133 // pred_check
          %p1435 = pneg %p180
        $region136: #{patch_merging.1} parent=133 // pred_check_branch
          %1437 = sbr.rel (%p1435) target = $region138
        $region137: #{patch_merging.1} parent=133 // pred_region
          %s1438 = sand.u32 %s165, 1
          %s1439 = scalar_lea.sflag [#allocation5], %s1438
          %s1440 = sand.u32 %s165, 1
          %s1441 = smul.addr %s1440, 64
          %s1442 = scalar_lea.vmem [#allocation4], %s1441
          %1443 = dma.done %s1439, 1024
        $region138: #{patch_merging.1} parent=133 // pred_fallthru
          _
      $region134: #{patch_merging.1} parent=5 // pred_fallthru
        _
    $region6: #{patch_merging.1} parent=1 // loop_footer
      %s19 = sadd.s32 1, %s15
    $region7: #{patch_merging.1} parent=1 // loop_footer_branch
      %14 = sbr.rel target = $region3
    $region8: #{patch_merging.1} parent=1 // loop_exit
      _
    %1444 = vsyncpa [#allocation5], 1
    %s1445 = scalar_lea.sflag [#allocation5], 1
    %1446 = vsyncpa %s1445, 1

</llo_original>
